<compile_context>
chip_gen: v7x
topology: tpu7x:2x2x1
jax: 0.10.0
libtpu: 0.0.40
codegen_flags: <defaults>
</compile_context>

<pallas_src>
import functools

import jax
import jax.numpy as jnp
from jax import lax
from jax.experimental import pallas as pl
from jax.experimental.pallas import tpu as pltpu

EPS = 1e-5


def _round_up(x, m):
    return ((x + m - 1) // m) * m


def _vmem_limit_bytes():
    """~75% of physical VMEM: 96 MiB on v5e/v6e (128 MiB), 48 MiB on v7x (64 MiB)."""
    try:
        cap = pltpu.get_tpu_info().vmem_capacity_bytes
    except Exception:
        cap = 64 * 1024 * 1024
    return int(cap) * 3 // 4


def _choose_tiles(B, F_g, F_l, HW, itemsize, vmem_limit):
    """Pick (BT, TILE_N): batch-elements per block and lane tile width.

    Sized so the double-buffered streamed blocks (g, x in, x out, psi) plus f32
    intermediates stay well under the scoped VMEM limit while filling it as much as
    practical (large tiles amortize the ~0.35 us per-grid-step overhead).
    """
    hw_pad = _round_up(HW, 128)
    # streamed sublanes per lane: g + x (pass2/3 input) + out + psi; x4 headroom for
    # double-buffering and f32 intermediates / compiler temporaries.
    bytes_per_lane = max(1, (F_g + 2 * F_l + 2) * itemsize * 4)
    budget = vmem_limit // 2
    max_lanes = max(128, budget // bytes_per_lane)
    max_lanes = min(max_lanes, 8192)  # diminishing returns past a few K lanes

    if max_lanes >= hw_pad:
        tile_n = hw_pad
        # whole spatial extent fits in one tile -> grow over batch (amortize per-step
        # overhead at deep U-Net levels where HW is small).
        bt = 1
        for d in range(1, B + 1):
            if B % d == 0 and d * hw_pad <= max_lanes:
                bt = d
    else:
        tile_n = max(128, (max_lanes // 128) * 128)
        bt = 1
    return bt, tile_n


# ---------------------------------------------------------------------------
# Pass 1: per-channel sum / sum-of-squares of the pre-BN branch activations
# ---------------------------------------------------------------------------
def _stats_kernel(g_ref, x_ref, wg_ref, wx_ref,
                  sum_g_ref, ssq_g_ref, sum_x_ref, ssq_x_ref,
                  *, bt, tile_n, hw, need_mask):
    ni = pl.program_id(1)

    @pl.when(ni == 0)
    def _init():
        sum_g_ref[...] = jnp.zeros_like(sum_g_ref)
        ssq_g_ref[...] = jnp.zeros_like(ssq_g_ref)
        sum_x_ref[...] = jnp.zeros_like(sum_x_ref)
        ssq_x_ref[...] = jnp.zeros_like(ssq_x_ref)

    if need_mask:
        col = ni * tile_n + lax.broadcasted_iota(jnp.int32, (1, tile_n), 1)
        valid = col < hw

    f_int = wg_ref.shape[0]
    sg = jnp.zeros((f_int, 1), jnp.float32)
    qg = jnp.zeros((f_int, 1), jnp.float32)
    sx = jnp.zeros((f_int, 1), jnp.float32)
    qx = jnp.zeros((f_int, 1), jnp.float32)

    for b in range(bt):
        # native-dtype operands; MXU accumulates in f32
        ag = jnp.dot(wg_ref[...], g_ref[b], preferred_element_type=jnp.float32)
        ax = jnp.dot(wx_ref[...], x_ref[b], preferred_element_type=jnp.float32)
        if need_mask:
            ag = jnp.where(valid, ag, 0.0)
            ax = jnp.where(valid, ax, 0.0)
        sg += jnp.sum(ag, axis=1, keepdims=True)
        qg += jnp.sum(ag * ag, axis=1, keepdims=True)
        sx += jnp.sum(ax, axis=1, keepdims=True)
        qx += jnp.sum(ax * ax, axis=1, keepdims=True)

    sum_g_ref[...] += sg.reshape(sum_g_ref.shape)
    ssq_g_ref[...] += qg.reshape(ssq_g_ref.shape)
    sum_x_ref[...] += sx.reshape(sum_x_ref.shape)
    ssq_x_ref[...] += qx.reshape(ssq_x_ref.shape)


# ---------------------------------------------------------------------------
# Pass 2: recompute branches (BN folded into weights), ReLU, psi matmul
#         -> raw psi activation + psi sum / sum-of-squares accumulators
# ---------------------------------------------------------------------------
def _psi_kernel(g_ref, x_ref, wg_ref, wx_ref, sh_ref, wp_ref,
                p_ref, sum_p_ref, ssq_p_ref,
                *, bt, tile_n, hw, need_mask):
    ni = pl.program_id(1)

    @pl.when(ni == 0)
    def _init():
        sum_p_ref[...] = jnp.zeros_like(sum_p_ref)
        ssq_p_ref[...] = jnp.zeros_like(ssq_p_ref)

    if need_mask:
        col = ni * tile_n + lax.broadcasted_iota(jnp.int32, (1, tile_n), 1)
        valid = col < hw

    sh = sh_ref[...]                                   # (F_int, 1) f32
    sp = jnp.zeros((1, 1), jnp.float32)
    qp = jnp.zeros((1, 1), jnp.float32)

    for b in range(bt):
        ag = jnp.dot(wg_ref[...], g_ref[b], preferred_element_type=jnp.float32)
        ax = jnp.dot(wx_ref[...], x_ref[b], preferred_element_type=jnp.float32)
        h = jnp.maximum(ag + ax + sh, 0.0)             # (F_int, TILE_N) f32
        p = jnp.dot(wp_ref[...], h.astype(wp_ref.dtype),
                    preferred_element_type=jnp.float32)  # (1, TILE_N)
        p_ref[b] = p                                    # garbage lanes past HW are clipped
        pm = jnp.where(valid, p, 0.0) if need_mask else p
        sp += jnp.sum(pm, axis=1, keepdims=True)
        qp += jnp.sum(pm * pm, axis=1, keepdims=True)

    sum_p_ref[...] += sp.reshape(sum_p_ref.shape)
    ssq_p_ref[...] += qp.reshape(ssq_p_ref.shape)


# ---------------------------------------------------------------------------
# Pass 3: psi-BN + sigmoid, gate the skip connection x
# ---------------------------------------------------------------------------
def _gate_kernel(x_ref, p_ref, scp_ref, shp_ref, out_ref, *, bt):
    sc = scp_ref[...]                                  # (1, 1) f32
    sh = shp_ref[...]
    for b in range(bt):
        p = p_ref[b]                                   # (1, TILE_N) f32
        alpha = jax.nn.sigmoid(p * sc + sh).astype(x_ref.dtype)
        out_ref[b] = (alpha * x_ref[b]).astype(out_ref.dtype)


# ---------------------------------------------------------------------------
# Forward
# ---------------------------------------------------------------------------
def attention_block_forward(g_nchw, x_nchw, params):
    """g_nchw: (B, F_g, H, W); x_nchw: (B, F_l, H, W). Returns (B, F_l, H, W)."""
    B, F_g, H, W = g_nchw.shape
    _, F_l, _, _ = x_nchw.shape
    HW = H * W
    F_int = params["wg"].shape[0]                      # wg stored as (F_int, F_g)

    vmem_limit = _vmem_limit_bytes()
    itemsize = jnp.dtype(g_nchw.dtype).itemsize
    BT, TILE_N = _choose_tiles(B, F_g, F_l, HW, itemsize, vmem_limit)
    num_b = B // BT
    num_n = pl.cdiv(HW, TILE_N)
    need_mask = (HW % TILE_N) != 0

    # free reshapes (no transpose): NCHW -> (B, C, H*W)
    g3 = g_nchw.reshape(B, F_g, HW)
    x3 = x_nchw.reshape(B, F_l, HW)

    cdt = g3.dtype                                     # native compute dtype for MXU operands
    wg_in = params["wg"].astype(cdt)                   # (F_int, F_g)
    wx_in = params["wx"].astype(cdt)                   # (F_int, F_l)
    # NOTE: conv biases bg/bx/bp are intentionally NOT used -- training-mode BN's
    # mean subtraction cancels them exactly.

    full = lambda shp: pl.BlockSpec(shp, lambda bi, ni: (0,) * len(shp))
    g_spec = pl.BlockSpec((BT, F_g, TILE_N), lambda bi, ni: (bi, 0, ni))
    x_spec = pl.BlockSpec((BT, F_l, TILE_N), lambda bi, ni: (bi, 0, ni))
    p_spec = pl.BlockSpec((BT, 1, TILE_N), lambda bi, ni: (bi, 0, ni))
    acc_spec = pl.BlockSpec((1, F_int, 1), lambda bi, ni: (bi, 0, 0))
    pacc_spec = pl.BlockSpec((1, 1, 1), lambda bi, ni: (bi, 0, 0))

    # ---- pass 1: global BN statistics of both branches --------------------
    sum_g, ssq_g, sum_x, ssq_x = pl.pallas_call(
        functools.partial(_stats_kernel, bt=BT, tile_n=TILE_N, hw=HW,
                          need_mask=need_mask),
        out_shape=(jax.ShapeDtypeStruct((num_b, F_int, 1), jnp.float32),) * 4,
        grid=(num_b, num_n),
        in_specs=[g_spec, x_spec, full((F_int, F_g)), full((F_int, F_l))],
        out_specs=(acc_spec,) * 4,
        compiler_params=pltpu.CompilerParams(
            dimension_semantics=("parallel", "arbitrary"),
            vmem_limit_bytes=vmem_limit,
        ),
    )(g3, x3, wg_in, wx_in)

    n_total = float(B * HW)

    def fold_bn(s, ss, bn_w, bn_b):
        s = jnp.sum(s, axis=0)                         # (F_int, 1) across batch blocks
        ss = jnp.sum(ss, axis=0)
        mu = s / n_total
        var = jnp.maximum(ss / n_total - mu * mu, 0.0)
        sc = bn_w.astype(jnp.float32) * lax.rsqrt(var + EPS)
        sh = bn_b.astype(jnp.float32) - mu * sc
        return sc, sh

    sc_g, sh_g = fold_bn(sum_g, ssq_g, params["gbn_w"], params["gbn_b"])   # (F_int, 1)
    sc_x, sh_x = fold_bn(sum_x, ssq_x, params["xbn_w"], params["xbn_b"])   # (F_int, 1)

    # fold BN scales into the 1x1 conv weights; single combined shift
    wg_f = (sc_g * params["wg"].astype(jnp.float32)).astype(cdt)           # (F_int, F_g)
    wx_f = (sc_x * params["wx"].astype(jnp.float32)).astype(cdt)           # (F_int, F_l)
    sh_gx = (sh_g + sh_x).astype(jnp.float32)                              # (F_int, 1)
    wp_in = params["wp"].astype(cdt)                                       # (1, F_int)

    # ---- pass 2: raw psi activation + psi statistics ----------------------
    p_raw, sum_p, ssq_p = pl.pallas_call(
        functools.partial(_psi_kernel, bt=BT, tile_n=TILE_N, hw=HW,
                          need_mask=need_mask),
        out_shape=(jax.ShapeDtypeStruct((B, 1, HW), jnp.float32),
                   jax.ShapeDtypeStruct((num_b, 1, 1), jnp.float32),
                   jax.ShapeDtypeStruct((num_b, 1, 1), jnp.float32)),
        grid=(num_b, num_n),
        in_specs=[g_spec, x_spec,
                  full((F_int, F_g)), full((F_int, F_l)),
                  full((F_int, 1)), full((1, F_int))],
        out_specs=(p_spec, pacc_spec, pacc_spec),
        compiler_params=pltpu.CompilerParams(
            dimension_semantics=("parallel", "arbitrary"),
            vmem_limit_bytes=vmem_limit,
        ),
    )(g3, x3, wg_f, wx_f, sh_gx, wp_in)

    # psi BN has a single channel: fold its scale/shift from the in-kernel accumulators
    mu_p = jnp.sum(sum_p) / n_total
    var_p = jnp.maximum(jnp.sum(ssq_p) / n_total - mu_p * mu_p, 0.0)
    sc_p = params["pbn_w"].astype(jnp.float32).reshape(1, 1) * lax.rsqrt(var_p + EPS)
    sh_p = params["pbn_b"].astype(jnp.float32).reshape(1, 1) - mu_p * sc_p

    # ---- pass 3: psi-BN + sigmoid + gate ----------------------------------
    out3 = pl.pallas_call(
        functools.partial(_gate_kernel, bt=BT),
        out_shape=jax.ShapeDtypeStruct((B, F_l, HW), x_nchw.dtype),
        grid=(num_b, num_n),
        in_specs=[x_spec, p_spec, full((1, 1)), full((1, 1))],
        out_specs=x_spec,
        compiler_params=pltpu.CompilerParams(
            dimension_semantics=("parallel", "parallel"),
            vmem_limit_bytes=vmem_limit,
        ),
    )(x3, p_raw, sc_p, sh_p)

    return out3.reshape(B, F_l, H, W)


# ---------------------------------------------------------------------------
# Pure-JAX reference mirroring the PyTorch forward (training-mode BN, with biases)
# ---------------------------------------------------------------------------
def _reference(g_nchw, x_nchw, params):
    B, F_g, H, W = g_nchw.shape
    _, F_l, _, _ = x_nchw.shape
    HW = H * W
    g = jnp.transpose(g_nchw.reshape(B, F_g, HW), (1, 0, 2)).reshape(F_g, B * HW)
    x = jnp.transpose(x_nchw.reshape(B, F_l, HW), (1, 0, 2)).reshape(F_l, B * HW)
    g = g.astype(jnp.float32)
    x = x.astype(jnp.float32)

    def bn(a, w, b):  # a: (C, N); w/b: (C, 1)
        mu = a.mean(axis=1, keepdims=True)
        var = ((a - mu) ** 2).mean(axis=1, keepdims=True)
        return (a - mu) / jnp.sqrt(var + EPS) * w + b

    ag = bn(params["wg"] @ g + params["bg"], params["gbn_w"], params["gbn_b"])
    ax = bn(params["wx"] @ x + params["bx"], params["xbn_w"], params["xbn_b"])
    h = jnp.maximum(ag + ax, 0.0)
    p = bn(params["wp"] @ h + params["bp"], params["pbn_w"], params["pbn_b"])
    out = jax.nn.sigmoid(p) * x                       # (F_l, B*HW)
    out = jnp.transpose(out.reshape(F_l, B, HW), (1, 0, 2)).reshape(B, F_l, H, W)
    return out.astype(x_nchw.dtype)


def make_params(key, F_g, F_l, F_int, dtype=jnp.float32):
    ks = jax.random.split(key, 8)
    return {
        # 1x1 conv weights stored channels-first: (Cout, Cin); biases (Cout, 1)
        "wg": 0.2 * jax.random.normal(ks[0], (F_int, F_g), dtype),
        "bg": 0.1 * jax.random.normal(ks[1], (F_int, 1), dtype),
        "wx": 0.2 * jax.random.normal(ks[2], (F_int, F_l), dtype),
        "bx": 0.1 * jax.random.normal(ks[3], (F_int, 1), dtype),
        "wp": 0.2 * jax.random.normal(ks[4], (1, F_int), dtype),
        "bp": 0.1 * jax.random.normal(ks[5], (1, 1), dtype),
        # BatchNorm affine params (perturbed slightly so the affine path is exercised)
        "gbn_w": 1.0 + 0.1 * jax.random.normal(ks[6], (F_int, 1), dtype),
        "gbn_b": jnp.zeros((F_int, 1), dtype),
        "xbn_w": 1.0 + 0.1 * jax.random.normal(ks[7], (F_int, 1), dtype),
        "xbn_b": jnp.zeros((F_int, 1), dtype),
        "pbn_w": jnp.ones((1, 1), dtype),
        "pbn_b": jnp.zeros((1, 1), dtype),
    }


if __name__ == "__main__":
    # Small shapes consistent with the module: attention_block(F_g=8, F_l=8, F_int=4)
    B, F_g, F_l, F_int, H, W = 2, 8, 8, 4, 16, 16

    key = jax.random.PRNGKey(0)
    kg, kx, kp = jax.random.split(key, 3)
    g = jax.random.normal(kg, (B, F_g, H, W), jnp.float32)
    x = jax.random.normal(kx, (B, F_l, H, W), jnp.float32)
    params = make_params(kp, F_g, F_l, F_int)

    fwd = jax.jit(attention_block_forward)
    out = jax.block_until_ready(fwd(g, x, params))

    ref = _reference(g, x, params)
    assert out.shape == (B, F_l, H, W)
    assert jnp.allclose(out, ref, atol=1e-4, rtol=1e-4), "mismatch vs JAX reference"

    print("KERNEL_OK")
</pallas_src>

<mosaic_0001>
module attributes {stable_mosaic.version = 11 : i64} {
  func.func @_stats_kernel(%arg0: i32, %arg1: i32, %arg2: memref<2x8x256xf32, #tpu.memory_space<vmem>>, %arg3: memref<2x8x256xf32, #tpu.memory_space<vmem>>, %arg4: memref<4x8xf32, #tpu.memory_space<vmem>>, %arg5: memref<4x8xf32, #tpu.memory_space<vmem>>, %arg6: memref<1x4x1xf32, #tpu.memory_space<vmem>>, %arg7: memref<1x4x1xf32, #tpu.memory_space<vmem>>, %arg8: memref<1x4x1xf32, #tpu.memory_space<vmem>>, %arg9: memref<1x4x1xf32, #tpu.memory_space<vmem>>) attributes {dimension_semantics = [#tpu.dimension_semantics<parallel>, #tpu.dimension_semantics<arbitrary>], iteration_bounds = array<i64: 1, 1>, scalar_prefetch = 0 : i64, scratch_operands = 0 : i64, tpu.core_type = #tpu.core_type<tc>, window_params = [{transform_indices = @transform_0, window_bounds = array<i64: 2, 8, 256>}, {transform_indices = @transform_1, window_bounds = array<i64: 2, 8, 256>}, {pipeline_mode = #tpu.pipeline_mode<synchronous>, transform_indices = @transform_2, window_bounds = array<i64: 4, 8>}, {pipeline_mode = #tpu.pipeline_mode<synchronous>, transform_indices = @transform_3, window_bounds = array<i64: 4, 8>}, {transform_indices = @transform_4, window_bounds = array<i64: 1, 4, 1>}, {transform_indices = @transform_5, window_bounds = array<i64: 1, 4, 1>}, {transform_indices = @transform_6, window_bounds = array<i64: 1, 4, 1>}, {transform_indices = @transform_7, window_bounds = array<i64: 1, 4, 1>}]} {
    %c0_i32 = arith.constant 0 : i32
    %0 = arith.cmpi eq, %arg1, %c0_i32 : i32
    %1 = arith.extui %0 : i1 to i32
    %c0_i32_0 = arith.constant 0 : i32
    %2 = arith.cmpi ne, %1, %c0_i32_0 : i32
    scf.if %2 {
      %cst_58 = arith.constant 0.000000e+00 : f32
      %67 = vector.broadcast %cst_58 : f32 to vector<1x4x1xf32>
      %c0_59 = arith.constant 0 : index
      %c0_60 = arith.constant 0 : index
      %c0_61 = arith.constant 0 : index
      %68 = vector.load %arg6[%c0_59, %c0_60, %c0_61] : memref<1x4x1xf32, #tpu.memory_space<vmem>>, vector<1x4x1xf32>
      tpu.vector_store %arg6[%c0_59, %c0_60, %c0_61], %67 {strides = array<i32>} : memref<1x4x1xf32, #tpu.memory_space<vmem>>, vector<1x4x1xf32>,
      %cst_62 = arith.constant 0.000000e+00 : f32
      %69 = vector.broadcast %cst_62 : f32 to vector<1x4x1xf32>
      %c0_63 = arith.constant 0 : index
      %c0_64 = arith.constant 0 : index
      %c0_65 = arith.constant 0 : index
      %70 = vector.load %arg7[%c0_63, %c0_64, %c0_65] : memref<1x4x1xf32, #tpu.memory_space<vmem>>, vector<1x4x1xf32>
      tpu.vector_store %arg7[%c0_63, %c0_64, %c0_65], %69 {strides = array<i32>} : memref<1x4x1xf32, #tpu.memory_space<vmem>>, vector<1x4x1xf32>,
      %cst_66 = arith.constant 0.000000e+00 : f32
      %71 = vector.broadcast %cst_66 : f32 to vector<1x4x1xf32>
      %c0_67 = arith.constant 0 : index
      %c0_68 = arith.constant 0 : index
      %c0_69 = arith.constant 0 : index
      %72 = vector.load %arg8[%c0_67, %c0_68, %c0_69] : memref<1x4x1xf32, #tpu.memory_space<vmem>>, vector<1x4x1xf32>
      tpu.vector_store %arg8[%c0_67, %c0_68, %c0_69], %71 {strides = array<i32>} : memref<1x4x1xf32, #tpu.memory_space<vmem>>, vector<1x4x1xf32>,
      %cst_70 = arith.constant 0.000000e+00 : f32
      %73 = vector.broadcast %cst_70 : f32 to vector<1x4x1xf32>
      %c0_71 = arith.constant 0 : index
      %c0_72 = arith.constant 0 : index
      %c0_73 = arith.constant 0 : index
      %74 = vector.load %arg9[%c0_71, %c0_72, %c0_73] : memref<1x4x1xf32, #tpu.memory_space<vmem>>, vector<1x4x1xf32>
      tpu.vector_store %arg9[%c0_71, %c0_72, %c0_73], %73 {strides = array<i32>} : memref<1x4x1xf32, #tpu.memory_space<vmem>>, vector<1x4x1xf32>,
    } else {
    }
    %cst = arith.constant 0.000000e+00 : f32
    %3 = vector.broadcast %cst : f32 to vector<4x1xf32>
    %cst_1 = arith.constant 0.000000e+00 : f32
    %4 = vector.broadcast %cst_1 : f32 to vector<4x1xf32>
    %cst_2 = arith.constant 0.000000e+00 : f32
    %5 = vector.broadcast %cst_2 : f32 to vector<4x1xf32>
    %cst_3 = arith.constant 0.000000e+00 : f32
    %6 = vector.broadcast %cst_3 : f32 to vector<4x1xf32>
    %c0 = arith.constant 0 : index
    %c0_4 = arith.constant 0 : index
    %7 = vector.load %arg4[%c0, %c0_4] : memref<4x8xf32, #tpu.memory_space<vmem>>, vector<4x8xf32>
    %c0_5 = arith.constant 0 : index
    %c0_6 = arith.constant 0 : index
    %c0_7 = arith.constant 0 : index
    %8 = vector.load %arg2[%c0_5, %c0_6, %c0_7] : memref<2x8x256xf32, #tpu.memory_space<vmem>>, vector<1x8x256xf32>
    %9 = vector.shape_cast %8 : vector<1x8x256xf32> to vector<8x256xf32>
    %cst_8 = arith.constant dense<0.000000e+00> : vector<4x256xf32>
    %10 = tpu.matmul %7, %9, %cst_8 {dimension_numbers = #tpu.dot_dimension_numbers<[1], [0], [0], [1], [0, 0, 1, 1], [], []>} : vector<4x8xf32>, vector<8x256xf32>, vector<4x256xf32> -> vector<4x256xf32>
    %c0_9 = arith.constant 0 : index
    %c0_10 = arith.constant 0 : index
    %11 = vector.load %arg5[%c0_9, %c0_10] : memref<4x8xf32, #tpu.memory_space<vmem>>, vector<4x8xf32>
    %c0_11 = arith.constant 0 : index
    %c0_12 = arith.constant 0 : index
    %c0_13 = arith.constant 0 : index
    %12 = vector.load %arg3[%c0_11, %c0_12, %c0_13] : memref<2x8x256xf32, #tpu.memory_space<vmem>>, vector<1x8x256xf32>
    %13 = vector.shape_cast %12 : vector<1x8x256xf32> to vector<8x256xf32>
    %cst_14 = arith.constant dense<0.000000e+00> : vector<4x256xf32>
    %14 = tpu.matmul %11, %13, %cst_14 {dimension_numbers = #tpu.dot_dimension_numbers<[1], [0], [0], [1], [0, 0, 1, 1], [], []>} : vector<4x8xf32>, vector<8x256xf32>, vector<4x256xf32> -> vector<4x256xf32>
    %cst_15 = arith.constant dense<0.000000e+00> : vector<4xf32>
    %15 = vector.multi_reduction <add>, %10, %cst_15 [1] : vector<4x256xf32> to vector<4xf32>
    %16 = vector.shape_cast %15 : vector<4xf32> to vector<4x1xf32>
    %17 = arith.addf %3, %16 : vector<4x1xf32>
    %18 = arith.mulf %10, %10 : vector<4x256xf32>
    %cst_16 = arith.constant dense<0.000000e+00> : vector<4xf32>
    %19 = vector.multi_reduction <add>, %18, %cst_16 [1] : vector<4x256xf32> to vector<4xf32>
    %20 = vector.shape_cast %19 : vector<4xf32> to vector<4x1xf32>
    %21 = arith.addf %4, %20 : vector<4x1xf32>
    %cst_17 = arith.constant dense<0.000000e+00> : vector<4xf32>
    %22 = vector.multi_reduction <add>, %14, %cst_17 [1] : vector<4x256xf32> to vector<4xf32>
    %23 = vector.shape_cast %22 : vector<4xf32> to vector<4x1xf32>
    %24 = arith.addf %5, %23 : vector<4x1xf32>
    %25 = arith.mulf %14, %14 : vector<4x256xf32>
    %cst_18 = arith.constant dense<0.000000e+00> : vector<4xf32>
    %26 = vector.multi_reduction <add>, %25, %cst_18 [1] : vector<4x256xf32> to vector<4xf32>
    %27 = vector.shape_cast %26 : vector<4xf32> to vector<4x1xf32>
    %28 = arith.addf %6, %27 : vector<4x1xf32>
    %c0_19 = arith.constant 0 : index
    %c0_20 = arith.constant 0 : index
    %29 = vector.load %arg4[%c0_19, %c0_20] : memref<4x8xf32, #tpu.memory_space<vmem>>, vector<4x8xf32>
    %c1 = arith.constant 1 : index
    %c0_21 = arith.constant 0 : index
    %c0_22 = arith.constant 0 : index
    %30 = vector.load %arg2[%c1, %c0_21, %c0_22] : memref<2x8x256xf32, #tpu.memory_space<vmem>>, vector<1x8x256xf32>
    %31 = vector.shape_cast %30 : vector<1x8x256xf32> to vector<8x256xf32>
    %cst_23 = arith.constant dense<0.000000e+00> : vector<4x256xf32>
    %32 = tpu.matmul %29, %31, %cst_23 {dimension_numbers = #tpu.dot_dimension_numbers<[1], [0], [0], [1], [0, 0, 1, 1], [], []>} : vector<4x8xf32>, vector<8x256xf32>, vector<4x256xf32> -> vector<4x256xf32>
    %c0_24 = arith.constant 0 : index
    %c0_25 = arith.constant 0 : index
    %33 = vector.load %arg5[%c0_24, %c0_25] : memref<4x8xf32, #tpu.memory_space<vmem>>, vector<4x8xf32>
    %c1_26 = arith.constant 1 : index
    %c0_27 = arith.constant 0 : index
    %c0_28 = arith.constant 0 : index
    %34 = vector.load %arg3[%c1_26, %c0_27, %c0_28] : memref<2x8x256xf32, #tpu.memory_space<vmem>>, vector<1x8x256xf32>
    %35 = vector.shape_cast %34 : vector<1x8x256xf32> to vector<8x256xf32>
    %cst_29 = arith.constant dense<0.000000e+00> : vector<4x256xf32>
    %36 = tpu.matmul %33, %35, %cst_29 {dimension_numbers = #tpu.dot_dimension_numbers<[1], [0], [0], [1], [0, 0, 1, 1], [], []>} : vector<4x8xf32>, vector<8x256xf32>, vector<4x256xf32> -> vector<4x256xf32>
    %cst_30 = arith.constant dense<0.000000e+00> : vector<4xf32>
    %37 = vector.multi_reduction <add>, %32, %cst_30 [1] : vector<4x256xf32> to vector<4xf32>
    %38 = vector.shape_cast %37 : vector<4xf32> to vector<4x1xf32>
    %39 = arith.addf %17, %38 : vector<4x1xf32>
    %40 = arith.mulf %32, %32 : vector<4x256xf32>
    %cst_31 = arith.constant dense<0.000000e+00> : vector<4xf32>
    %41 = vector.multi_reduction <add>, %40, %cst_31 [1] : vector<4x256xf32> to vector<4xf32>
    %42 = vector.shape_cast %41 : vector<4xf32> to vector<4x1xf32>
    %43 = arith.addf %21, %42 : vector<4x1xf32>
    %cst_32 = arith.constant dense<0.000000e+00> : vector<4xf32>
    %44 = vector.multi_reduction <add>, %36, %cst_32 [1] : vector<4x256xf32> to vector<4xf32>
    %45 = vector.shape_cast %44 : vector<4xf32> to vector<4x1xf32>
    %46 = arith.addf %24, %45 : vector<4x1xf32>
    %47 = arith.mulf %36, %36 : vector<4x256xf32>
    %cst_33 = arith.constant dense<0.000000e+00> : vector<4xf32>
    %48 = vector.multi_reduction <add>, %47, %cst_33 [1] : vector<4x256xf32> to vector<4xf32>
    %49 = vector.shape_cast %48 : vector<4xf32> to vector<4x1xf32>
    %50 = arith.addf %28, %49 : vector<4x1xf32>
    %c0_34 = arith.constant 0 : index
    %c0_35 = arith.constant 0 : index
    %c0_36 = arith.constant 0 : index
    %51 = vector.load %arg6[%c0_34, %c0_35, %c0_36] : memref<1x4x1xf32, #tpu.memory_space<vmem>>, vector<1x4x1xf32>
    %52 = vector.shape_cast %39 : vector<4x1xf32> to vector<1x4x1xf32>
    %53 = arith.addf %51, %52 : vector<1x4x1xf32>
    %c0_37 = arith.constant 0 : index
    %c0_38 = arith.constant 0 : index
    %c0_39 = arith.constant 0 : index
    %54 = vector.load %arg6[%c0_37, %c0_38, %c0_39] : memref<1x4x1xf32, #tpu.memory_space<vmem>>, vector<1x4x1xf32>
    tpu.vector_store %arg6[%c0_37, %c0_38, %c0_39], %53 {strides = array<i32>} : memref<1x4x1xf32, #tpu.memory_space<vmem>>, vector<1x4x1xf32>,
    %c0_40 = arith.constant 0 : index
    %c0_41 = arith.constant 0 : index
    %c0_42 = arith.constant 0 : index
    %55 = vector.load %arg7[%c0_40, %c0_41, %c0_42] : memref<1x4x1xf32, #tpu.memory_space<vmem>>, vector<1x4x1xf32>
    %56 = vector.shape_cast %43 : vector<4x1xf32> to vector<1x4x1xf32>
    %57 = arith.addf %55, %56 : vector<1x4x1xf32>
    %c0_43 = arith.constant 0 : index
    %c0_44 = arith.constant 0 : index
    %c0_45 = arith.constant 0 : index
    %58 = vector.load %arg7[%c0_43, %c0_44, %c0_45] : memref<1x4x1xf32, #tpu.memory_space<vmem>>, vector<1x4x1xf32>
    tpu.vector_store %arg7[%c0_43, %c0_44, %c0_45], %57 {strides = array<i32>} : memref<1x4x1xf32, #tpu.memory_space<vmem>>, vector<1x4x1xf32>,
    %c0_46 = arith.constant 0 : index
    %c0_47 = arith.constant 0 : index
    %c0_48 = arith.constant 0 : index
    %59 = vector.load %arg8[%c0_46, %c0_47, %c0_48] : memref<1x4x1xf32, #tpu.memory_space<vmem>>, vector<1x4x1xf32>
    %60 = vector.shape_cast %46 : vector<4x1xf32> to vector<1x4x1xf32>
    %61 = arith.addf %59, %60 : vector<1x4x1xf32>
    %c0_49 = arith.constant 0 : index
    %c0_50 = arith.constant 0 : index
    %c0_51 = arith.constant 0 : index
    %62 = vector.load %arg8[%c0_49, %c0_50, %c0_51] : memref<1x4x1xf32, #tpu.memory_space<vmem>>, vector<1x4x1xf32>
    tpu.vector_store %arg8[%c0_49, %c0_50, %c0_51], %61 {strides = array<i32>} : memref<1x4x1xf32, #tpu.memory_space<vmem>>, vector<1x4x1xf32>,
    %c0_52 = arith.constant 0 : index
    %c0_53 = arith.constant 0 : index
    %c0_54 = arith.constant 0 : index
    %63 = vector.load %arg9[%c0_52, %c0_53, %c0_54] : memref<1x4x1xf32, #tpu.memory_space<vmem>>, vector<1x4x1xf32>
    %64 = vector.shape_cast %50 : vector<4x1xf32> to vector<1x4x1xf32>
    %65 = arith.addf %63, %64 : vector<1x4x1xf32>
    %c0_55 = arith.constant 0 : index
    %c0_56 = arith.constant 0 : index
    %c0_57 = arith.constant 0 : index
    %66 = vector.load %arg9[%c0_55, %c0_56, %c0_57] : memref<1x4x1xf32, #tpu.memory_space<vmem>>, vector<1x4x1xf32>
    tpu.vector_store %arg9[%c0_55, %c0_56, %c0_57], %65 {strides = array<i32>} : memref<1x4x1xf32, #tpu.memory_space<vmem>>, vector<1x4x1xf32>,
    return
  }
  func.func @transform_0(%arg0: i32, %arg1: i32) -> (i32, i32, i32) {
    %c0_i32 = arith.constant 0 : i32
    %c0_i32_0 = arith.constant 0 : i32
    return %arg0, %c0_i32, %arg1 : i32, i32, i32
  }
  func.func @transform_1(%arg0: i32, %arg1: i32) -> (i32, i32, i32) {
    %c0_i32 = arith.constant 0 : i32
    %c0_i32_0 = arith.constant 0 : i32
    return %arg0, %c0_i32, %arg1 : i32, i32, i32
  }
  func.func @transform_2(%arg0: i32, %arg1: i32) -> (i32, i32) {
    %c0_i32 = arith.constant 0 : i32
    %c0_i32_0 = arith.constant 0 : i32
    %c0_i32_1 = arith.constant 0 : i32
    return %c0_i32, %c0_i32_0 : i32, i32
  }
  func.func @transform_3(%arg0: i32, %arg1: i32) -> (i32, i32) {
    %c0_i32 = arith.constant 0 : i32
    %c0_i32_0 = arith.constant 0 : i32
    %c0_i32_1 = arith.constant 0 : i32
    return %c0_i32, %c0_i32_0 : i32, i32
  }
  func.func @transform_4(%arg0: i32, %arg1: i32) -> (i32, i32, i32) {
    %c0_i32 = arith.constant 0 : i32
    %c0_i32_0 = arith.constant 0 : i32
    %c0_i32_1 = arith.constant 0 : i32
    return %arg0, %c0_i32, %c0_i32_0 : i32, i32, i32
  }
  func.func @transform_5(%arg0: i32, %arg1: i32) -> (i32, i32, i32) {
    %c0_i32 = arith.constant 0 : i32
    %c0_i32_0 = arith.constant 0 : i32
    %c0_i32_1 = arith.constant 0 : i32
    return %arg0, %c0_i32, %c0_i32_0 : i32, i32, i32
  }
  func.func @transform_6(%arg0: i32, %arg1: i32) -> (i32, i32, i32) {
    %c0_i32 = arith.constant 0 : i32
    %c0_i32_0 = arith.constant 0 : i32
    %c0_i32_1 = arith.constant 0 : i32
    return %arg0, %c0_i32, %c0_i32_0 : i32, i32, i32
  }
  func.func @transform_7(%arg0: i32, %arg1: i32) -> (i32, i32, i32) {
    %c0_i32 = arith.constant 0 : i32
    %c0_i32_0 = arith.constant 0 : i32
    %c0_i32_1 = arith.constant 0 : i32
    return %arg0, %c0_i32, %c0_i32_0 : i32, i32, i32
  }
}

module attributes {stable_mosaic.version = 11 : i64} {
  func.func @_psi_kernel(%arg0: i32, %arg1: i32, %arg2: memref<2x8x256xf32, #tpu.memory_space<vmem>>, %arg3: memref<2x8x256xf32, #tpu.memory_space<vmem>>, %arg4: memref<4x8xf32, #tpu.memory_space<vmem>>, %arg5: memref<4x8xf32, #tpu.memory_space<vmem>>, %arg6: memref<4x1xf32, #tpu.memory_space<vmem>>, %arg7: memref<1x4xf32, #tpu.memory_space<vmem>>, %arg8: memref<2x1x256xf32, #tpu.memory_space<vmem>>, %arg9: memref<1x1x1xf32, #tpu.memory_space<vmem>>, %arg10: memref<1x1x1xf32, #tpu.memory_space<vmem>>) attributes {dimension_semantics = [#tpu.dimension_semantics<parallel>, #tpu.dimension_semantics<arbitrary>], iteration_bounds = array<i64: 1, 1>, scalar_prefetch = 0 : i64, scratch_operands = 0 : i64, tpu.core_type = #tpu.core_type<tc>, window_params = [{transform_indices = @transform_0, window_bounds = array<i64: 2, 8, 256>}, {transform_indices = @transform_1, window_bounds = array<i64: 2, 8, 256>}, {pipeline_mode = #tpu.pipeline_mode<synchronous>, transform_indices = @transform_2, window_bounds = array<i64: 4, 8>}, {pipeline_mode = #tpu.pipeline_mode<synchronous>, transform_indices = @transform_3, window_bounds = array<i64: 4, 8>}, {pipeline_mode = #tpu.pipeline_mode<synchronous>, transform_indices = @transform_4, window_bounds = array<i64: 4, 1>}, {pipeline_mode = #tpu.pipeline_mode<synchronous>, transform_indices = @transform_5, window_bounds = array<i64: 1, 4>}, {transform_indices = @transform_6, window_bounds = array<i64: 2, 1, 256>}, {transform_indices = @transform_7, window_bounds = array<i64: 1, 1, 1>}, {transform_indices = @transform_8, window_bounds = array<i64: 1, 1, 1>}]} {
    %c0_i32 = arith.constant 0 : i32
    %0 = arith.cmpi eq, %arg1, %c0_i32 : i32
    %1 = arith.extui %0 : i1 to i32
    %c0_i32_0 = arith.constant 0 : i32
    %2 = arith.cmpi ne, %1, %c0_i32_0 : i32
    scf.if %2 {
      %cst_56 = arith.constant 0.000000e+00 : f32
      %64 = vector.broadcast %cst_56 : f32 to vector<1x1x1xf32>
      %c0_57 = arith.constant 0 : index
      %c0_58 = arith.constant 0 : index
      %c0_59 = arith.constant 0 : index
      %65 = vector.load %arg9[%c0_57, %c0_58, %c0_59] : memref<1x1x1xf32, #tpu.memory_space<vmem>>, vector<1x1x1xf32>
      tpu.vector_store %arg9[%c0_57, %c0_58, %c0_59], %64 {strides = array<i32>} : memref<1x1x1xf32, #tpu.memory_space<vmem>>, vector<1x1x1xf32>,
      %cst_60 = arith.constant 0.000000e+00 : f32
      %66 = vector.broadcast %cst_60 : f32 to vector<1x1x1xf32>
      %c0_61 = arith.constant 0 : index
      %c0_62 = arith.constant 0 : index
      %c0_63 = arith.constant 0 : index
      %67 = vector.load %arg10[%c0_61, %c0_62, %c0_63] : memref<1x1x1xf32, #tpu.memory_space<vmem>>, vector<1x1x1xf32>
      tpu.vector_store %arg10[%c0_61, %c0_62, %c0_63], %66 {strides = array<i32>} : memref<1x1x1xf32, #tpu.memory_space<vmem>>, vector<1x1x1xf32>,
    } else {
    }
    %c0 = arith.constant 0 : index
    %c0_1 = arith.constant 0 : index
    %3 = vector.load %arg6[%c0, %c0_1] : memref<4x1xf32, #tpu.memory_space<vmem>>, vector<4x1xf32>
    %cst = arith.constant 0.000000e+00 : f32
    %4 = vector.broadcast %cst : f32 to vector<1x1xf32>
    %cst_2 = arith.constant 0.000000e+00 : f32
    %5 = vector.broadcast %cst_2 : f32 to vector<1x1xf32>
    %c0_3 = arith.constant 0 : index
    %c0_4 = arith.constant 0 : index
    %6 = vector.load %arg4[%c0_3, %c0_4] : memref<4x8xf32, #tpu.memory_space<vmem>>, vector<4x8xf32>
    %c0_5 = arith.constant 0 : index
    %c0_6 = arith.constant 0 : index
    %c0_7 = arith.constant 0 : index
    %7 = vector.load %arg2[%c0_5, %c0_6, %c0_7] : memref<2x8x256xf32, #tpu.memory_space<vmem>>, vector<1x8x256xf32>
    %8 = vector.shape_cast %7 : vector<1x8x256xf32> to vector<8x256xf32>
    %cst_8 = arith.constant dense<0.000000e+00> : vector<4x256xf32>
    %9 = tpu.matmul %6, %8, %cst_8 {dimension_numbers = #tpu.dot_dimension_numbers<[1], [0], [0], [1], [0, 0, 1, 1], [], []>} : vector<4x8xf32>, vector<8x256xf32>, vector<4x256xf32> -> vector<4x256xf32>
    %c0_9 = arith.constant 0 : index
    %c0_10 = arith.constant 0 : index
    %10 = vector.load %arg5[%c0_9, %c0_10] : memref<4x8xf32, #tpu.memory_space<vmem>>, vector<4x8xf32>
    %c0_11 = arith.constant 0 : index
    %c0_12 = arith.constant 0 : index
    %c0_13 = arith.constant 0 : index
    %11 = vector.load %arg3[%c0_11, %c0_12, %c0_13] : memref<2x8x256xf32, #tpu.memory_space<vmem>>, vector<1x8x256xf32>
    %12 = vector.shape_cast %11 : vector<1x8x256xf32> to vector<8x256xf32>
    %cst_14 = arith.constant dense<0.000000e+00> : vector<4x256xf32>
    %13 = tpu.matmul %10, %12, %cst_14 {dimension_numbers = #tpu.dot_dimension_numbers<[1], [0], [0], [1], [0, 0, 1, 1], [], []>} : vector<4x8xf32>, vector<8x256xf32>, vector<4x256xf32> -> vector<4x256xf32>
    %14 = arith.addf %9, %13 : vector<4x256xf32>
    %15 = vector.broadcast %3 : vector<4x1xf32> to vector<4x256xf32>
    %16 = arith.addf %14, %15 : vector<4x256xf32>
    %cst_15 = arith.constant 0.000000e+00 : f32
    %17 = vector.broadcast %cst_15 : f32 to vector<4x256xf32>
    %18 = arith.maximumf %16, %17 : vector<4x256xf32>
    %c0_16 = arith.constant 0 : index
    %c0_17 = arith.constant 0 : index
    %19 = vector.load %arg7[%c0_16, %c0_17] : memref<1x4xf32, #tpu.memory_space<vmem>>, vector<1x4xf32>
    %cst_18 = arith.constant dense<0.000000e+00> : vector<1x256xf32>
    %20 = tpu.matmul %19, %18, %cst_18 {dimension_numbers = #tpu.dot_dimension_numbers<[1], [0], [0], [1], [0, 0, 1, 1], [], []>} : vector<1x4xf32>, vector<4x256xf32>, vector<1x256xf32> -> vector<1x256xf32>
    %c0_19 = arith.constant 0 : index
    %c0_20 = arith.constant 0 : index
    %c0_21 = arith.constant 0 : index
    %21 = vector.load %arg8[%c0_19, %c0_20, %c0_21] : memref<2x1x256xf32, #tpu.memory_space<vmem>>, vector<1x1x256xf32>
    %22 = vector.shape_cast %21 : vector<1x1x256xf32> to vector<1x256xf32>
    %23 = vector.shape_cast %20 : vector<1x256xf32> to vector<1x1x256xf32>
    tpu.vector_store %arg8[%c0_19, %c0_20, %c0_21], %23 {strides = array<i32>} : memref<2x1x256xf32, #tpu.memory_space<vmem>>, vector<1x1x256xf32>,
    %cst_22 = arith.constant dense<0.000000e+00> : vector<1xf32>
    %24 = vector.multi_reduction <add>, %20, %cst_22 [1] : vector<1x256xf32> to vector<1xf32>
    %25 = vector.shape_cast %24 : vector<1xf32> to vector<1x1xf32>
    %26 = arith.addf %4, %25 : vector<1x1xf32>
    %27 = arith.mulf %20, %20 : vector<1x256xf32>
    %cst_23 = arith.constant dense<0.000000e+00> : vector<1xf32>
    %28 = vector.multi_reduction <add>, %27, %cst_23 [1] : vector<1x256xf32> to vector<1xf32>
    %29 = vector.shape_cast %28 : vector<1xf32> to vector<1x1xf32>
    %30 = arith.addf %5, %29 : vector<1x1xf32>
    %c0_24 = arith.constant 0 : index
    %c0_25 = arith.constant 0 : index
    %31 = vector.load %arg4[%c0_24, %c0_25] : memref<4x8xf32, #tpu.memory_space<vmem>>, vector<4x8xf32>
    %c1 = arith.constant 1 : index
    %c0_26 = arith.constant 0 : index
    %c0_27 = arith.constant 0 : index
    %32 = vector.load %arg2[%c1, %c0_26, %c0_27] : memref<2x8x256xf32, #tpu.memory_space<vmem>>, vector<1x8x256xf32>
    %33 = vector.shape_cast %32 : vector<1x8x256xf32> to vector<8x256xf32>
    %cst_28 = arith.constant dense<0.000000e+00> : vector<4x256xf32>
    %34 = tpu.matmul %31, %33, %cst_28 {dimension_numbers = #tpu.dot_dimension_numbers<[1], [0], [0], [1], [0, 0, 1, 1], [], []>} : vector<4x8xf32>, vector<8x256xf32>, vector<4x256xf32> -> vector<4x256xf32>
    %c0_29 = arith.constant 0 : index
    %c0_30 = arith.constant 0 : index
    %35 = vector.load %arg5[%c0_29, %c0_30] : memref<4x8xf32, #tpu.memory_space<vmem>>, vector<4x8xf32>
    %c1_31 = arith.constant 1 : index
    %c0_32 = arith.constant 0 : index
    %c0_33 = arith.constant 0 : index
    %36 = vector.load %arg3[%c1_31, %c0_32, %c0_33] : memref<2x8x256xf32, #tpu.memory_space<vmem>>, vector<1x8x256xf32>
    %37 = vector.shape_cast %36 : vector<1x8x256xf32> to vector<8x256xf32>
    %cst_34 = arith.constant dense<0.000000e+00> : vector<4x256xf32>
    %38 = tpu.matmul %35, %37, %cst_34 {dimension_numbers = #tpu.dot_dimension_numbers<[1], [0], [0], [1], [0, 0, 1, 1], [], []>} : vector<4x8xf32>, vector<8x256xf32>, vector<4x256xf32> -> vector<4x256xf32>
    %39 = arith.addf %34, %38 : vector<4x256xf32>
    %40 = vector.broadcast %3 : vector<4x1xf32> to vector<4x256xf32>
    %41 = arith.addf %39, %40 : vector<4x256xf32>
    %cst_35 = arith.constant 0.000000e+00 : f32
    %42 = vector.broadcast %cst_35 : f32 to vector<4x256xf32>
    %43 = arith.maximumf %41, %42 : vector<4x256xf32>
    %c0_36 = arith.constant 0 : index
    %c0_37 = arith.constant 0 : index
    %44 = vector.load %arg7[%c0_36, %c0_37] : memref<1x4xf32, #tpu.memory_space<vmem>>, vector<1x4xf32>
    %cst_38 = arith.constant dense<0.000000e+00> : vector<1x256xf32>
    %45 = tpu.matmul %44, %43, %cst_38 {dimension_numbers = #tpu.dot_dimension_numbers<[1], [0], [0], [1], [0, 0, 1, 1], [], []>} : vector<1x4xf32>, vector<4x256xf32>, vector<1x256xf32> -> vector<1x256xf32>
    %c1_39 = arith.constant 1 : index
    %c0_40 = arith.constant 0 : index
    %c0_41 = arith.constant 0 : index
    %46 = vector.load %arg8[%c1_39, %c0_40, %c0_41] : memref<2x1x256xf32, #tpu.memory_space<vmem>>, vector<1x1x256xf32>
    %47 = vector.shape_cast %46 : vector<1x1x256xf32> to vector<1x256xf32>
    %48 = vector.shape_cast %45 : vector<1x256xf32> to vector<1x1x256xf32>
    tpu.vector_store %arg8[%c1_39, %c0_40, %c0_41], %48 {strides = array<i32>} : memref<2x1x256xf32, #tpu.memory_space<vmem>>, vector<1x1x256xf32>,
    %cst_42 = arith.constant dense<0.000000e+00> : vector<1xf32>
    %49 = vector.multi_reduction <add>, %45, %cst_42 [1] : vector<1x256xf32> to vector<1xf32>
    %50 = vector.shape_cast %49 : vector<1xf32> to vector<1x1xf32>
    %51 = arith.addf %26, %50 : vector<1x1xf32>
    %52 = arith.mulf %45, %45 : vector<1x256xf32>
    %cst_43 = arith.constant dense<0.000000e+00> : vector<1xf32>
    %53 = vector.multi_reduction <add>, %52, %cst_43 [1] : vector<1x256xf32> to vector<1xf32>
    %54 = vector.shape_cast %53 : vector<1xf32> to vector<1x1xf32>
    %55 = arith.addf %30, %54 : vector<1x1xf32>
    %c0_44 = arith.constant 0 : index
    %c0_45 = arith.constant 0 : index
    %c0_46 = arith.constant 0 : index
    %56 = vector.load %arg9[%c0_44, %c0_45, %c0_46] : memref<1x1x1xf32, #tpu.memory_space<vmem>>, vector<1x1x1xf32>
    %57 = vector.shape_cast %51 : vector<1x1xf32> to vector<1x1x1xf32>
    %58 = arith.addf %56, %57 : vector<1x1x1xf32>
    %c0_47 = arith.constant 0 : index
    %c0_48 = arith.constant 0 : index
    %c0_49 = arith.constant 0 : index
    %59 = vector.load %arg9[%c0_47, %c0_48, %c0_49] : memref<1x1x1xf32, #tpu.memory_space<vmem>>, vector<1x1x1xf32>
    tpu.vector_store %arg9[%c0_47, %c0_48, %c0_49], %58 {strides = array<i32>} : memref<1x1x1xf32, #tpu.memory_space<vmem>>, vector<1x1x1xf32>,
    %c0_50 = arith.constant 0 : index
    %c0_51 = arith.constant 0 : index
    %c0_52 = arith.constant 0 : index
    %60 = vector.load %arg10[%c0_50, %c0_51, %c0_52] : memref<1x1x1xf32, #tpu.memory_space<vmem>>, vector<1x1x1xf32>
    %61 = vector.shape_cast %55 : vector<1x1xf32> to vector<1x1x1xf32>
    %62 = arith.addf %60, %61 : vector<1x1x1xf32>
    %c0_53 = arith.constant 0 : index
    %c0_54 = arith.constant 0 : index
    %c0_55 = arith.constant 0 : index
    %63 = vector.load %arg10[%c0_53, %c0_54, %c0_55] : memref<1x1x1xf32, #tpu.memory_space<vmem>>, vector<1x1x1xf32>
    tpu.vector_store %arg10[%c0_53, %c0_54, %c0_55], %62 {strides = array<i32>} : memref<1x1x1xf32, #tpu.memory_space<vmem>>, vector<1x1x1xf32>,
    return
  }
  func.func @transform_0(%arg0: i32, %arg1: i32) -> (i32, i32, i32) {
    %c0_i32 = arith.constant 0 : i32
    %c0_i32_0 = arith.constant 0 : i32
    return %arg0, %c0_i32, %arg1 : i32, i32, i32
  }
  func.func @transform_1(%arg0: i32, %arg1: i32) -> (i32, i32, i32) {
    %c0_i32 = arith.constant 0 : i32
    %c0_i32_0 = arith.constant 0 : i32
    return %arg0, %c0_i32, %arg1 : i32, i32, i32
  }
  func.func @transform_2(%arg0: i32, %arg1: i32) -> (i32, i32) {
    %c0_i32 = arith.constant 0 : i32
    %c0_i32_0 = arith.constant 0 : i32
    %c0_i32_1 = arith.constant 0 : i32
    return %c0_i32, %c0_i32_0 : i32, i32
  }
  func.func @transform_3(%arg0: i32, %arg1: i32) -> (i32, i32) {
    %c0_i32 = arith.constant 0 : i32
    %c0_i32_0 = arith.constant 0 : i32
    %c0_i32_1 = arith.constant 0 : i32
    return %c0_i32, %c0_i32_0 : i32, i32
  }
  func.func @transform_4(%arg0: i32, %arg1: i32) -> (i32, i32) {
    %c0_i32 = arith.constant 0 : i32
    %c0_i32_0 = arith.constant 0 : i32
    %c0_i32_1 = arith.constant 0 : i32
    return %c0_i32, %c0_i32_0 : i32, i32
  }
  func.func @transform_5(%arg0: i32, %arg1: i32) -> (i32, i32) {
    %c0_i32 = arith.constant 0 : i32
    %c0_i32_0 = arith.constant 0 : i32
    %c0_i32_1 = arith.constant 0 : i32
    return %c0_i32, %c0_i32_0 : i32, i32
  }
  func.func @transform_6(%arg0: i32, %arg1: i32) -> (i32, i32, i32) {
    %c0_i32 = arith.constant 0 : i32
    %c0_i32_0 = arith.constant 0 : i32
    return %arg0, %c0_i32, %arg1 : i32, i32, i32
  }
  func.func @transform_7(%arg0: i32, %arg1: i32) -> (i32, i32, i32) {
    %c0_i32 = arith.constant 0 : i32
    %c0_i32_0 = arith.constant 0 : i32
    %c0_i32_1 = arith.constant 0 : i32
    return %arg0, %c0_i32, %c0_i32_0 : i32, i32, i32
  }
  func.func @transform_8(%arg0: i32, %arg1: i32) -> (i32, i32, i32) {
    %c0_i32 = arith.constant 0 : i32
    %c0_i32_0 = arith.constant 0 : i32
    %c0_i32_1 = arith.constant 0 : i32
    return %arg0, %c0_i32, %c0_i32_0 : i32, i32, i32
  }
}

module attributes {stable_mosaic.version = 11 : i64} {
  func.func @_gate_kernel(%arg0: i32, %arg1: i32, %arg2: memref<2x8x256xf32, #tpu.memory_space<vmem>>, %arg3: memref<2x1x256xf32, #tpu.memory_space<vmem>>, %arg4: memref<1x1xf32, #tpu.memory_space<vmem>>, %arg5: memref<1x1xf32, #tpu.memory_space<vmem>>, %arg6: memref<2x8x256xf32, #tpu.memory_space<vmem>>) attributes {dimension_semantics = [#tpu.dimension_semantics<parallel>, #tpu.dimension_semantics<parallel>], iteration_bounds = array<i64: 1, 1>, scalar_prefetch = 0 : i64, scratch_operands = 0 : i64, tpu.core_type = #tpu.core_type<tc>, window_params = [{transform_indices = @transform_0, window_bounds = array<i64: 2, 8, 256>}, {transform_indices = @transform_1, window_bounds = array<i64: 2, 1, 256>}, {pipeline_mode = #tpu.pipeline_mode<synchronous>, transform_indices = @transform_2, window_bounds = array<i64: 1, 1>}, {pipeline_mode = #tpu.pipeline_mode<synchronous>, transform_indices = @transform_3, window_bounds = array<i64: 1, 1>}, {transform_indices = @transform_4, window_bounds = array<i64: 2, 8, 256>}]} {
    %c0 = arith.constant 0 : index
    %c0_0 = arith.constant 0 : index
    %0 = vector.load %arg4[%c0, %c0_0] : memref<1x1xf32, #tpu.memory_space<vmem>>, vector<1x1xf32>
    %c0_1 = arith.constant 0 : index
    %c0_2 = arith.constant 0 : index
    %1 = vector.load %arg5[%c0_1, %c0_2] : memref<1x1xf32, #tpu.memory_space<vmem>>, vector<1x1xf32>
    %c0_3 = arith.constant 0 : index
    %c0_4 = arith.constant 0 : index
    %c0_5 = arith.constant 0 : index
    %2 = vector.load %arg3[%c0_3, %c0_4, %c0_5] : memref<2x1x256xf32, #tpu.memory_space<vmem>>, vector<1x1x256xf32>
    %3 = vector.shape_cast %2 : vector<1x1x256xf32> to vector<1x256xf32>
    %4 = vector.broadcast %0 : vector<1x1xf32> to vector<1x256xf32>
    %5 = arith.mulf %3, %4 : vector<1x256xf32>
    %6 = vector.broadcast %1 : vector<1x1xf32> to vector<1x256xf32>
    %7 = arith.addf %5, %6 : vector<1x256xf32>
    %8 = arith.negf %7 : vector<1x256xf32>
    %9 = math.exp %8 : vector<1x256xf32>
    %cst = arith.constant 1.000000e+00 : f32
    %10 = vector.broadcast %cst : f32 to vector<1x256xf32>
    %11 = arith.addf %10, %9 : vector<1x256xf32>
    %12 = arith.divf %10, %11 : vector<1x256xf32>
    %c0_6 = arith.constant 0 : index
    %c0_7 = arith.constant 0 : index
    %c0_8 = arith.constant 0 : index
    %13 = vector.load %arg2[%c0_6, %c0_7, %c0_8] : memref<2x8x256xf32, #tpu.memory_space<vmem>>, vector<1x8x256xf32>
    %14 = vector.shape_cast %13 : vector<1x8x256xf32> to vector<8x256xf32>
    %15 = vector.broadcast %12 : vector<1x256xf32> to vector<8x256xf32>
    %16 = arith.mulf %15, %14 : vector<8x256xf32>
    %c0_9 = arith.constant 0 : index
    %c0_10 = arith.constant 0 : index
    %c0_11 = arith.constant 0 : index
    %17 = vector.load %arg6[%c0_9, %c0_10, %c0_11] : memref<2x8x256xf32, #tpu.memory_space<vmem>>, vector<1x8x256xf32>
    %18 = vector.shape_cast %17 : vector<1x8x256xf32> to vector<8x256xf32>
    %19 = vector.shape_cast %16 : vector<8x256xf32> to vector<1x8x256xf32>
    tpu.vector_store %arg6[%c0_9, %c0_10, %c0_11], %19 {strides = array<i32>} : memref<2x8x256xf32, #tpu.memory_space<vmem>>, vector<1x8x256xf32>,
    %c1 = arith.constant 1 : index
    %c0_12 = arith.constant 0 : index
    %c0_13 = arith.constant 0 : index
    %20 = vector.load %arg3[%c1, %c0_12, %c0_13] : memref<2x1x256xf32, #tpu.memory_space<vmem>>, vector<1x1x256xf32>
    %21 = vector.shape_cast %20 : vector<1x1x256xf32> to vector<1x256xf32>
    %22 = vector.broadcast %0 : vector<1x1xf32> to vector<1x256xf32>
    %23 = arith.mulf %21, %22 : vector<1x256xf32>
    %24 = vector.broadcast %1 : vector<1x1xf32> to vector<1x256xf32>
    %25 = arith.addf %23, %24 : vector<1x256xf32>
    %26 = arith.negf %25 : vector<1x256xf32>
    %27 = math.exp %26 : vector<1x256xf32>
    %cst_14 = arith.constant 1.000000e+00 : f32
    %28 = vector.broadcast %cst_14 : f32 to vector<1x256xf32>
    %29 = arith.addf %28, %27 : vector<1x256xf32>
    %30 = arith.divf %28, %29 : vector<1x256xf32>
    %c1_15 = arith.constant 1 : index
    %c0_16 = arith.constant 0 : index
    %c0_17 = arith.constant 0 : index
    %31 = vector.load %arg2[%c1_15, %c0_16, %c0_17] : memref<2x8x256xf32, #tpu.memory_space<vmem>>, vector<1x8x256xf32>
    %32 = vector.shape_cast %31 : vector<1x8x256xf32> to vector<8x256xf32>
    %33 = vector.broadcast %30 : vector<1x256xf32> to vector<8x256xf32>
    %34 = arith.mulf %33, %32 : vector<8x256xf32>
    %c1_18 = arith.constant 1 : index
    %c0_19 = arith.constant 0 : index
    %c0_20 = arith.constant 0 : index
    %35 = vector.load %arg6[%c1_18, %c0_19, %c0_20] : memref<2x8x256xf32, #tpu.memory_space<vmem>>, vector<1x8x256xf32>
    %36 = vector.shape_cast %35 : vector<1x8x256xf32> to vector<8x256xf32>
    %37 = vector.shape_cast %34 : vector<8x256xf32> to vector<1x8x256xf32>
    tpu.vector_store %arg6[%c1_18, %c0_19, %c0_20], %37 {strides = array<i32>} : memref<2x8x256xf32, #tpu.memory_space<vmem>>, vector<1x8x256xf32>,
    return
  }
  func.func @transform_0(%arg0: i32, %arg1: i32) -> (i32, i32, i32) {
    %c0_i32 = arith.constant 0 : i32
    %c0_i32_0 = arith.constant 0 : i32
    return %arg0, %c0_i32, %arg1 : i32, i32, i32
  }
  func.func @transform_1(%arg0: i32, %arg1: i32) -> (i32, i32, i32) {
    %c0_i32 = arith.constant 0 : i32
    %c0_i32_0 = arith.constant 0 : i32
    return %arg0, %c0_i32, %arg1 : i32, i32, i32
  }
  func.func @transform_2(%arg0: i32, %arg1: i32) -> (i32, i32) {
    %c0_i32 = arith.constant 0 : i32
    %c0_i32_0 = arith.constant 0 : i32
    %c0_i32_1 = arith.constant 0 : i32
    return %c0_i32, %c0_i32_0 : i32, i32
  }
  func.func @transform_3(%arg0: i32, %arg1: i32) -> (i32, i32) {
    %c0_i32 = arith.constant 0 : i32
    %c0_i32_0 = arith.constant 0 : i32
    %c0_i32_1 = arith.constant 0 : i32
    return %c0_i32, %c0_i32_0 : i32, i32
  }
  func.func @transform_4(%arg0: i32, %arg1: i32) -> (i32, i32, i32) {
    %c0_i32 = arith.constant 0 : i32
    %c0_i32_0 = arith.constant 0 : i32
    return %arg0, %c0_i32, %arg1 : i32, i32, i32
  }
}

</mosaic_0001>

<llo_original>
// kernel: attention_block_forward.3
$region0: #{attention_block_forward.3}
  #allocation0 [shape = 'u32[]', space=smem, size = 0x4, offset = 0x4, fixed_abs, tag = 'smem constant byte address 0x4 - core index']
  #allocation1 [shape = 'u32[144,128]{1,0:T(1,128)}', space=vmem, size = 0x12000, scoped, tag = 'internal scratch']
  %s0 = inlined_call_operand.vmem [shape: f32[2,8,256], index: 0, kind: input, shape index: {}]
  %s1 = inlined_call_operand.vmem [shape: f32[2,8,256], index: 1, kind: input, shape index: {}]
  %s2 = inlined_call_operand.vmem [shape: f32[4,8], index: 2, kind: input, shape index: {}]
  %s3 = inlined_call_operand.vmem [shape: f32[4,8], index: 3, kind: input, shape index: {}]
  %s4 = inlined_call_operand.vmem [shape: f32[1,4,1], index: 4, kind: output, shape index: {0}]
  %s5 = inlined_call_operand.vmem [shape: f32[1,4,1], index: 5, kind: output, shape index: {1}]
  %s6 = inlined_call_operand.vmem [shape: f32[1,4,1], index: 6, kind: output, shape index: {2}]
  %s7 = inlined_call_operand.vmem [shape: f32[1,4,1], index: 7, kind: output, shape index: {3}]
  %8 = xla_tuple %s4, %s5, %s6, %s7
  %s9 = sld [smem:[#allocation0]]
  $region54: #{attention_block_forward.3} parent=0
    _
  %s11 = ssub.s32 1, %s9
  %s12 = scalar_select 0, %s11, %s9
  // Predicated region
  $region2: #{attention_block_forward.3} parent=0 // pred_check
    _
  $region3: #{attention_block_forward.3} parent=0 // pred_check_branch
    %14 = sbr.rel (0) target = $region5
  $region4: #{attention_block_forward.3} parent=0 // pred_region
    _
  $region5: #{attention_block_forward.3} parent=0 // pred_fallthru
    _
  // Predicated region
  $region6: #{attention_block_forward.3} parent=0 // pred_check
    _
  $region7: #{attention_block_forward.3} parent=0 // pred_check_branch
    %16 = sbr.rel (0) target = $region9
  $region8: #{attention_block_forward.3} parent=0 // pred_region
    _
  $region9: #{attention_block_forward.3} parent=0 // pred_fallthru
    _
  // Predicated region
  $region10: #{attention_block_forward.3} parent=0 // pred_check
    _
  $region11: #{attention_block_forward.3} parent=0 // pred_check_branch
    %18 = sbr.rel (0) target = $region13
  $region12: #{attention_block_forward.3} parent=0 // pred_region
    _
  $region13: #{attention_block_forward.3} parent=0 // pred_fallthru
    _
  // Predicated region
  $region14: #{attention_block_forward.3} parent=0 // pred_check
    _
  $region15: #{attention_block_forward.3} parent=0 // pred_check_branch
    %20 = sbr.rel (0) target = $region17
  $region16: #{attention_block_forward.3} parent=0 // pred_region
    _
  $region17: #{attention_block_forward.3} parent=0 // pred_fallthru
    _
  %p21 = scmp.eq.s32.totalorder 0, 0
  // Predicated region
  $region18: #{attention_block_forward.3} parent=0 // pred_check
    %p22 = pneg %p21
  $region19: #{attention_block_forward.3} parent=0 // pred_check_branch
    %24 = sbr.rel (%p22) target = $region21
  $region20: #{attention_block_forward.3} parent=0 // pred_region
    %vm25 = vcmask 3072
    %26 = vst.msk [vmem:[%s4] sm:$0xf] %vm25, 0.0
    %27 = vst.msk [vmem:[%s5] sm:$0xf] %vm25, 0.0
    %28 = vst.msk [vmem:[%s6] sm:$0xf] %vm25, 0.0
    %29 = vst.msk [vmem:[%s7] sm:$0xf] %vm25, 0.0
  $region21: #{attention_block_forward.3} parent=0 // pred_fallthru
    _
  %v30 = vld [vmem:[%s2] sm:$0xf]
  %v31 = vld [vmem:[%s0] sm:$0xff]
  %v32 = vld [vmem:[%s0 + $0x8] sm:$0xff]
  %vm33 = vcmask 64512
  %v35 = vsel %vm33, %v30, 0
  %37 = vmatprep.subr.mxu0 %v32
  %38 = vmatpush1.msra.mxu0 %v31
  %39 = vmatprep.subr.mxu0 0.0
  %40 = vmatpush1.msra.mxu0 0.0
  %41 = vmatprep.subr.mxu0 0.0
  %42 = vmatpush1.msra.mxu0 0.0
  %43 = vmatprep.subr.mxu0 0.0
  %44 = vmatpush1.msra.mxu0 0.0
  %45 = vmatprep.subr.mxu0 0.0
  %46 = vmatpush1.msra.mxu0 0.0
  %47 = vmatprep.subr.mxu0 0.0
  %48 = vmatpush1.msra.mxu0 0.0
  %49 = vmatprep.subr.mxu0 0.0
  %50 = vmatpush1.msra.mxu0 0.0
  %51 = vmatprep.subr.mxu0 0.0
  %52 = vmatpush1.msra.mxu0 0.0
  %53 = vmatprep.subr.mxu0 0.0
  %54 = vmatpush1.msra.mxu0 0.0
  %55 = vmatprep.subr.mxu0 0.0
  %56 = vmatpush1.msra.mxu0 0.0
  %57 = vmatprep.subr.mxu0 0.0
  %58 = vmatpush1.msra.mxu0 0.0
  %59 = vmatprep.subr.mxu0 0.0
  %60 = vmatpush1.msra.mxu0 0.0
  %61 = vmatprep.subr.mxu0 0.0
  %62 = vmatpush1.msra.mxu0 0.0
  %63 = vmatprep.subr.mxu0 0.0
  %64 = vmatpush1.msra.mxu0 0.0
  %65 = vmatprep.subr.mxu0 0.0
  %66 = vmatpush1.msra.mxu0 0.0
  %67 = vmatprep.subr.mxu0 0.0
  %68 = vmatpush1.msra.mxu0 0.0
  %69 = vmatprep.subr.mxu0 0.0
  %70 = vmatpush1.msra.mxu0 0.0
  %71 = vmatprep.subr.mxu0 0.0
  %72 = vmatpush1.msra.mxu0 0.0
  %73 = vmatprep.subr.mxu0 0.0
  %74 = vmatpush1.msra.mxu0 0.0
  %75 = vmatprep.subr.mxu0 0.0
  %76 = vmatpush1.msra.mxu0 0.0
  %77 = vmatprep.subr.mxu0 0.0
  %78 = vmatpush1.msra.mxu0 0.0
  %79 = vmatprep.subr.mxu0 0.0
  %80 = vmatpush1.msra.mxu0 0.0
  %81 = vmatprep.subr.mxu0 0.0
  %82 = vmatpush1.msra.mxu0 0.0
  %83 = vmatprep.subr.mxu0 0.0
  %84 = vmatpush1.msra.mxu0 0.0
  %85 = vmatprep.subr.mxu0 0.0
  %86 = vmatpush1.msra.mxu0 0.0
  %87 = vmatprep.subr.mxu0 0.0
  %88 = vmatpush1.msra.mxu0 0.0
  %89 = vmatprep.subr.mxu0 0.0
  %90 = vmatpush1.msra.mxu0 0.0
  %91 = vmatprep.subr.mxu0 0.0
  %92 = vmatpush1.msra.mxu0 0.0
  %93 = vmatprep.subr.mxu0 0.0
  %94 = vmatpush1.msra.mxu0 0.0
  %95 = vmatprep.subr.mxu0 0.0
  %96 = vmatpush1.msra.mxu0 0.0
  %97 = vmatprep.subr.mxu0 0.0
  %98 = vmatpush1.msra.mxu0 0.0
  %99 = vmatprep.subr.mxu0 0.0
  %100 = vmatpush1.msra.mxu0 0.0
  %101 = vmatprep.mubr.f32.mxu0 0.0
  %102 = vmatmul.mubr.f32.gmra.mrb[0].mxu0 %v35
  %v103 = vpop.f32.mrb[0].mxu0
  %v104 = vadd.f32 0.0, %v103
  %v105 = vpop.f32.mrb[0].mxu0
  %v106 = vadd.f32 0.0, %v105
  %107 = vdwg.mxu0
  %v108 = vld [vmem:[%s3] sm:$0xf]
  %v109 = vld [vmem:[%s1] sm:$0xff]
  %v110 = vld [vmem:[%s1 + $0x8] sm:$0xff]
  %v112 = vsel %vm33, %v108, 0
  %114 = vmatprep.subr.mxu0 %v110
  %115 = vmatpush1.msra.mxu0 %v109
  %116 = vmatprep.subr.mxu0 0.0
  %117 = vmatpush1.msra.mxu0 0.0
  %118 = vmatprep.subr.mxu0 0.0
  %119 = vmatpush1.msra.mxu0 0.0
  %120 = vmatprep.subr.mxu0 0.0
  %121 = vmatpush1.msra.mxu0 0.0
  %122 = vmatprep.subr.mxu0 0.0
  %123 = vmatpush1.msra.mxu0 0.0
  %124 = vmatprep.subr.mxu0 0.0
  %125 = vmatpush1.msra.mxu0 0.0
  %126 = vmatprep.subr.mxu0 0.0
  %127 = vmatpush1.msra.mxu0 0.0
  %128 = vmatprep.subr.mxu0 0.0
  %129 = vmatpush1.msra.mxu0 0.0
  %130 = vmatprep.subr.mxu0 0.0
  %131 = vmatpush1.msra.mxu0 0.0
  %132 = vmatprep.subr.mxu0 0.0
  %133 = vmatpush1.msra.mxu0 0.0
  %134 = vmatprep.subr.mxu0 0.0
  %135 = vmatpush1.msra.mxu0 0.0
  %136 = vmatprep.subr.mxu0 0.0
  %137 = vmatpush1.msra.mxu0 0.0
  %138 = vmatprep.subr.mxu0 0.0
  %139 = vmatpush1.msra.mxu0 0.0
  %140 = vmatprep.subr.mxu0 0.0
  %141 = vmatpush1.msra.mxu0 0.0
  %142 = vmatprep.subr.mxu0 0.0
  %143 = vmatpush1.msra.mxu0 0.0
  %144 = vmatprep.subr.mxu0 0.0
  %145 = vmatpush1.msra.mxu0 0.0
  %146 = vmatprep.subr.mxu0 0.0
  %147 = vmatpush1.msra.mxu0 0.0
  %148 = vmatprep.subr.mxu0 0.0
  %149 = vmatpush1.msra.mxu0 0.0
  %150 = vmatprep.subr.mxu0 0.0
  %151 = vmatpush1.msra.mxu0 0.0
  %152 = vmatprep.subr.mxu0 0.0
  %153 = vmatpush1.msra.mxu0 0.0
  %154 = vmatprep.subr.mxu0 0.0
  %155 = vmatpush1.msra.mxu0 0.0
  %156 = vmatprep.subr.mxu0 0.0
  %157 = vmatpush1.msra.mxu0 0.0
  %158 = vmatprep.subr.mxu0 0.0
  %159 = vmatpush1.msra.mxu0 0.0
  %160 = vmatprep.subr.mxu0 0.0
  %161 = vmatpush1.msra.mxu0 0.0
  %162 = vmatprep.subr.mxu0 0.0
  %163 = vmatpush1.msra.mxu0 0.0
  %164 = vmatprep.subr.mxu0 0.0
  %165 = vmatpush1.msra.mxu0 0.0
  %166 = vmatprep.subr.mxu0 0.0
  %167 = vmatpush1.msra.mxu0 0.0
  %168 = vmatprep.subr.mxu0 0.0
  %169 = vmatpush1.msra.mxu0 0.0
  %170 = vmatprep.subr.mxu0 0.0
  %171 = vmatpush1.msra.mxu0 0.0
  %172 = vmatprep.subr.mxu0 0.0
  %173 = vmatpush1.msra.mxu0 0.0
  %174 = vmatprep.subr.mxu0 0.0
  %175 = vmatpush1.msra.mxu0 0.0
  %176 = vmatprep.subr.mxu0 0.0
  %177 = vmatpush1.msra.mxu0 0.0
  %178 = vmatprep.mubr.f32.mxu0 0.0
  %179 = vmatmul.mubr.f32.gmra.mrb[0].mxu0 %v112
  %v180 = vpop.f32.mrb[0].mxu0
  %v181 = vadd.f32 0.0, %v180
  %v182 = vpop.f32.mrb[0].mxu0
  %v183 = vadd.f32 0.0, %v182
  %184 = vdwg.mxu0
  %vm185 = vcmask 1043456
  %v186 = vsel %vm185, %v104, 0.0
  %v187 = vsel %vm185, %v106, 0.0
  %v188 = vadd.f32 %v186, %v187
  %189 = vadd.xlane.f32.xlu0 %v188
  %v190 = vpop.xlane.xlu0 %189
  %v191 = vadd.f32 %v190, 0.0
  %v192 = vmul.f32 %v104, %v104
  %v193 = vmul.f32 %v106, %v106
  %v194 = vsel %vm185, %v192, 0.0
  %v195 = vsel %vm185, %v193, 0.0
  %v196 = vadd.f32 %v194, %v195
  %197 = vadd.xlane.f32.xlu0 %v196
  %v198 = vpop.xlane.xlu0 %197
  %v199 = vadd.f32 %v198, 0.0
  %v200 = vsel %vm185, %v181, 0.0
  %v201 = vsel %vm185, %v183, 0.0
  %v202 = vadd.f32 %v200, %v201
  %203 = vadd.xlane.f32.xlu0 %v202
  %v204 = vpop.xlane.xlu0 %203
  %v205 = vadd.f32 %v204, 0.0
  %v206 = vmul.f32 %v181, %v181
  %v207 = vmul.f32 %v183, %v183
  %v208 = vsel %vm185, %v206, 0.0
  %v209 = vsel %vm185, %v207, 0.0
  %v210 = vadd.f32 %v208, %v209
  %211 = vadd.xlane.f32.xlu0 %v210
  %v212 = vpop.xlane.xlu0 %211
  %v213 = vadd.f32 %v212, 0.0
  %s214 = scalar_lea.vmem %s0, 16
  %v215 = vld [vmem:[%s214] sm:$0xff]
  %v216 = vld [vmem:[%s214 + $0x8] sm:$0xff]
  %217 = vmatprep.subr.mxu0 %v216
  %218 = vmatpush1.msra.mxu0 %v215
  %219 = vmatprep.subr.mxu0 0.0
  %220 = vmatpush1.msra.mxu0 0.0
  %221 = vmatprep.subr.mxu0 0.0
  %222 = vmatpush1.msra.mxu0 0.0
  %223 = vmatprep.subr.mxu0 0.0
  %224 = vmatpush1.msra.mxu0 0.0
  %225 = vmatprep.subr.mxu0 0.0
  %226 = vmatpush1.msra.mxu0 0.0
  %227 = vmatprep.subr.mxu0 0.0
  %228 = vmatpush1.msra.mxu0 0.0
  %229 = vmatprep.subr.mxu0 0.0
  %230 = vmatpush1.msra.mxu0 0.0
  %231 = vmatprep.subr.mxu0 0.0
  %232 = vmatpush1.msra.mxu0 0.0
  %233 = vmatprep.subr.mxu0 0.0
  %234 = vmatpush1.msra.mxu0 0.0
  %235 = vmatprep.subr.mxu0 0.0
  %236 = vmatpush1.msra.mxu0 0.0
  %237 = vmatprep.subr.mxu0 0.0
  %238 = vmatpush1.msra.mxu0 0.0
  %239 = vmatprep.subr.mxu0 0.0
  %240 = vmatpush1.msra.mxu0 0.0
  %241 = vmatprep.subr.mxu0 0.0
  %242 = vmatpush1.msra.mxu0 0.0
  %243 = vmatprep.subr.mxu0 0.0
  %244 = vmatpush1.msra.mxu0 0.0
  %245 = vmatprep.subr.mxu0 0.0
  %246 = vmatpush1.msra.mxu0 0.0
  %247 = vmatprep.subr.mxu0 0.0
  %248 = vmatpush1.msra.mxu0 0.0
  %249 = vmatprep.subr.mxu0 0.0
  %250 = vmatpush1.msra.mxu0 0.0
  %251 = vmatprep.subr.mxu0 0.0
  %252 = vmatpush1.msra.mxu0 0.0
  %253 = vmatprep.subr.mxu0 0.0
  %254 = vmatpush1.msra.mxu0 0.0
  %255 = vmatprep.subr.mxu0 0.0
  %256 = vmatpush1.msra.mxu0 0.0
  %257 = vmatprep.subr.mxu0 0.0
  %258 = vmatpush1.msra.mxu0 0.0
  %259 = vmatprep.subr.mxu0 0.0
  %260 = vmatpush1.msra.mxu0 0.0
  %261 = vmatprep.subr.mxu0 0.0
  %262 = vmatpush1.msra.mxu0 0.0
  %263 = vmatprep.subr.mxu0 0.0
  %264 = vmatpush1.msra.mxu0 0.0
  %265 = vmatprep.subr.mxu0 0.0
  %266 = vmatpush1.msra.mxu0 0.0
  %267 = vmatprep.subr.mxu0 0.0
  %268 = vmatpush1.msra.mxu0 0.0
  %269 = vmatprep.subr.mxu0 0.0
  %270 = vmatpush1.msra.mxu0 0.0
  %271 = vmatprep.subr.mxu0 0.0
  %272 = vmatpush1.msra.mxu0 0.0
  %273 = vmatprep.subr.mxu0 0.0
  %274 = vmatpush1.msra.mxu0 0.0
  %275 = vmatprep.subr.mxu0 0.0
  %276 = vmatpush1.msra.mxu0 0.0
  %277 = vmatprep.subr.mxu0 0.0
  %278 = vmatpush1.msra.mxu0 0.0
  %279 = vmatprep.subr.mxu0 0.0
  %280 = vmatpush1.msra.mxu0 0.0
  %281 = vmatprep.mubr.f32.mxu0 0.0
  %282 = vmatmul.mubr.f32.gmra.mrb[0].mxu0 %v35
  %v283 = vpop.f32.mrb[0].mxu0
  %v284 = vadd.f32 0.0, %v283
  %v285 = vpop.f32.mrb[0].mxu0
  %v286 = vadd.f32 0.0, %v285
  %287 = vdwg.mxu0
  %s288 = scalar_lea.vmem %s1, 16
  %v289 = vld [vmem:[%s288] sm:$0xff]
  %v290 = vld [vmem:[%s288 + $0x8] sm:$0xff]
  %291 = vmatprep.subr.mxu0 %v290
  %292 = vmatpush1.msra.mxu0 %v289
  %293 = vmatprep.subr.mxu0 0.0
  %294 = vmatpush1.msra.mxu0 0.0
  %295 = vmatprep.subr.mxu0 0.0
  %296 = vmatpush1.msra.mxu0 0.0
  %297 = vmatprep.subr.mxu0 0.0
  %298 = vmatpush1.msra.mxu0 0.0
  %299 = vmatprep.subr.mxu0 0.0
  %300 = vmatpush1.msra.mxu0 0.0
  %301 = vmatprep.subr.mxu0 0.0
  %302 = vmatpush1.msra.mxu0 0.0
  %303 = vmatprep.subr.mxu0 0.0
  %304 = vmatpush1.msra.mxu0 0.0
  %305 = vmatprep.subr.mxu0 0.0
  %306 = vmatpush1.msra.mxu0 0.0
  %307 = vmatprep.subr.mxu0 0.0
  %308 = vmatpush1.msra.mxu0 0.0
  %309 = vmatprep.subr.mxu0 0.0
  %310 = vmatpush1.msra.mxu0 0.0
  %311 = vmatprep.subr.mxu0 0.0
  %312 = vmatpush1.msra.mxu0 0.0
  %313 = vmatprep.subr.mxu0 0.0
  %314 = vmatpush1.msra.mxu0 0.0
  %315 = vmatprep.subr.mxu0 0.0
  %316 = vmatpush1.msra.mxu0 0.0
  %317 = vmatprep.subr.mxu0 0.0
  %318 = vmatpush1.msra.mxu0 0.0
  %319 = vmatprep.subr.mxu0 0.0
  %320 = vmatpush1.msra.mxu0 0.0
  %321 = vmatprep.subr.mxu0 0.0
  %322 = vmatpush1.msra.mxu0 0.0
  %323 = vmatprep.subr.mxu0 0.0
  %324 = vmatpush1.msra.mxu0 0.0
  %325 = vmatprep.subr.mxu0 0.0
  %326 = vmatpush1.msra.mxu0 0.0
  %327 = vmatprep.subr.mxu0 0.0
  %328 = vmatpush1.msra.mxu0 0.0
  %329 = vmatprep.subr.mxu0 0.0
  %330 = vmatpush1.msra.mxu0 0.0
  %331 = vmatprep.subr.mxu0 0.0
  %332 = vmatpush1.msra.mxu0 0.0
  %333 = vmatprep.subr.mxu0 0.0
  %334 = vmatpush1.msra.mxu0 0.0
  %335 = vmatprep.subr.mxu0 0.0
  %336 = vmatpush1.msra.mxu0 0.0
  %337 = vmatprep.subr.mxu0 0.0
  %338 = vmatpush1.msra.mxu0 0.0
  %339 = vmatprep.subr.mxu0 0.0
  %340 = vmatpush1.msra.mxu0 0.0
  %341 = vmatprep.subr.mxu0 0.0
  %342 = vmatpush1.msra.mxu0 0.0
  %343 = vmatprep.subr.mxu0 0.0
  %344 = vmatpush1.msra.mxu0 0.0
  %345 = vmatprep.subr.mxu0 0.0
  %346 = vmatpush1.msra.mxu0 0.0
  %347 = vmatprep.subr.mxu0 0.0
  %348 = vmatpush1.msra.mxu0 0.0
  %349 = vmatprep.subr.mxu0 0.0
  %350 = vmatpush1.msra.mxu0 0.0
  %351 = vmatprep.subr.mxu0 0.0
  %352 = vmatpush1.msra.mxu0 0.0
  %353 = vmatprep.subr.mxu0 0.0
  %354 = vmatpush1.msra.mxu0 0.0
  %355 = vmatprep.mubr.f32.mxu0 0.0
  %356 = vmatmul.mubr.f32.gmra.mrb[0].mxu0 %v112
  %v357 = vpop.f32.mrb[0].mxu0
  %v358 = vadd.f32 0.0, %v357
  %v359 = vpop.f32.mrb[0].mxu0
  %v360 = vadd.f32 0.0, %v359
  %361 = vdwg.mxu0
  %v362 = vsel %vm185, %v284, 0.0
  %v363 = vsel %vm185, %v286, 0.0
  %v364 = vadd.f32 %v362, %v363
  %365 = vadd.xlane.f32.xlu0 %v364
  %v366 = vpop.xlane.xlu0 %365
  %v367 = vadd.f32 %v191, %v366
  %v368 = vmul.f32 %v284, %v284
  %v369 = vmul.f32 %v286, %v286
  %v370 = vsel %vm185, %v368, 0.0
  %v371 = vsel %vm185, %v369, 0.0
  %v372 = vadd.f32 %v370, %v371
  %373 = vadd.xlane.f32.xlu0 %v372
  %v374 = vpop.xlane.xlu0 %373
  %v375 = vadd.f32 %v199, %v374
  %v376 = vsel %vm185, %v358, 0.0
  %v377 = vsel %vm185, %v360, 0.0
  %v378 = vadd.f32 %v376, %v377
  %379 = vadd.xlane.f32.xlu0 %v378
  %v380 = vpop.xlane.xlu0 %379
  %v381 = vadd.f32 %v205, %v380
  %v382 = vmul.f32 %v358, %v358
  %v383 = vmul.f32 %v360, %v360
  %v384 = vsel %vm185, %v382, 0.0
  %v385 = vsel %vm185, %v383, 0.0
  %v386 = vadd.f32 %v384, %v385
  %387 = vadd.xlane.f32.xlu0 %v386
  %v388 = vpop.xlane.xlu0 %387
  %v389 = vadd.f32 %v213, %v388
  %v390 = vld [vmem:[%s4] sm:$0xf]
  %v391 = vadd.f32 %v390, %v367
  %vm392 = vcmask 3072
  %393 = vst.msk [vmem:[%s4] sm:$0xf] %vm392, %v391
  %v394 = vld [vmem:[%s5] sm:$0xf]
  %v395 = vadd.f32 %v394, %v375
  %396 = vst.msk [vmem:[%s5] sm:$0xf] %vm392, %v395
  %v397 = vld [vmem:[%s6] sm:$0xf]
  %v398 = vadd.f32 %v397, %v381
  %399 = vst.msk [vmem:[%s6] sm:$0xf] %vm392, %v398
  %v400 = vld [vmem:[%s7] sm:$0xf]
  %v401 = vadd.f32 %v400, %v389
  %402 = vst.msk [vmem:[%s7] sm:$0xf] %vm392, %v401
  // Predicated region
  $region22: #{attention_block_forward.3} parent=0 // pred_check
    _
  $region23: #{attention_block_forward.3} parent=0 // pred_check_branch
    %404 = sbr.rel (0) target = $region25
  $region24: #{attention_block_forward.3} parent=0 // pred_region
    _
  $region25: #{attention_block_forward.3} parent=0 // pred_fallthru
    _
  // Predicated region
  $region26: #{attention_block_forward.3} parent=0 // pred_check
    _
  $region27: #{attention_block_forward.3} parent=0 // pred_check_branch
    %406 = sbr.rel (0) target = $region29
  $region28: #{attention_block_forward.3} parent=0 // pred_region
    _
  $region29: #{attention_block_forward.3} parent=0 // pred_fallthru
    _
  // Predicated region
  $region30: #{attention_block_forward.3} parent=0 // pred_check
    _
  $region31: #{attention_block_forward.3} parent=0 // pred_check_branch
    %408 = sbr.rel (0) target = $region33
  $region32: #{attention_block_forward.3} parent=0 // pred_region
    _
  $region33: #{attention_block_forward.3} parent=0 // pred_fallthru
    _
  // Predicated region
  $region34: #{attention_block_forward.3} parent=0 // pred_check
    _
  $region35: #{attention_block_forward.3} parent=0 // pred_check_branch
    %410 = sbr.rel (0) target = $region37
  $region36: #{attention_block_forward.3} parent=0 // pred_region
    _
  $region37: #{attention_block_forward.3} parent=0 // pred_fallthru
    _
  // Predicated region
  $region38: #{attention_block_forward.3} parent=0 // pred_check
    _
  $region39: #{attention_block_forward.3} parent=0 // pred_check_branch
    %412 = sbr.rel (0) target = $region41
  $region40: #{attention_block_forward.3} parent=0 // pred_region
    _
  $region41: #{attention_block_forward.3} parent=0 // pred_fallthru
    _
  // Predicated region
  $region42: #{attention_block_forward.3} parent=0 // pred_check
    _
  $region43: #{attention_block_forward.3} parent=0 // pred_check_branch
    %414 = sbr.rel (0) target = $region45
  $region44: #{attention_block_forward.3} parent=0 // pred_region
    _
  $region45: #{attention_block_forward.3} parent=0 // pred_fallthru
    _
  // Predicated region
  $region46: #{attention_block_forward.3} parent=0 // pred_check
    _
  $region47: #{attention_block_forward.3} parent=0 // pred_check_branch
    %416 = sbr.rel (0) target = $region49
  $region48: #{attention_block_forward.3} parent=0 // pred_region
    _
  $region49: #{attention_block_forward.3} parent=0 // pred_fallthru
    _
  // Predicated region
  $region50: #{attention_block_forward.3} parent=0 // pred_check
    _
  $region51: #{attention_block_forward.3} parent=0 // pred_check_branch
    %418 = sbr.rel (0) target = $region53
  $region52: #{attention_block_forward.3} parent=0 // pred_region
    _
  $region53: #{attention_block_forward.3} parent=0 // pred_fallthru
    _

// kernel: attention_block_forward.5
$region0: #{attention_block_forward.5}
  #allocation0 [shape = 'u32[]', space=smem, size = 0x4, offset = 0x4, fixed_abs, tag = 'smem constant byte address 0x4 - core index']
  #allocation1 [shape = 'u32[144,128]{1,0:T(1,128)}', space=vmem, size = 0x12000, scoped, tag = 'internal scratch']
  #allocation2 [shape = 'f32[1,1]{1,0:T(1,128)S(1)}', space=vmem, size = 0x200, scoped, tag = 'scoped memory for attention_block_forward.5']
  #allocation3 [shape = 'f32[1,1]{1,0:T(1,128)S(1)}', space=vmem, size = 0x200, scoped, tag = 'scoped memory for attention_block_forward.5']
  %s0 = inlined_call_operand.vmem [shape: f32[2,8,256], index: 0, kind: input, shape index: {}]
  %s1 = inlined_call_operand.vmem [shape: f32[2,1,256], index: 1, kind: input, shape index: {}]
  %s2 = inlined_call_operand.<no memory space> [shape: f32[1,1], index: 2, kind: input, shape index: {}]
  %s3 = inlined_call_operand.<no memory space> [shape: f32[1,1], index: 3, kind: input, shape index: {}]
  %s4 = inlined_call_operand.vmem [shape: f32[2,8,256], index: 4, kind: output, shape index: {}]
  %s5 = sld [smem:[#allocation0]]
  $region26: #{attention_block_forward.5} parent=0
    _
  %s7 = ssub.s32 1, %s5
  %s8 = scalar_select 0, %s7, %s5
  %v9 = vstv %s2
  %10 = vst [vmem:[#allocation2] sm:$0x1] %v9
  %v11 = vstv %s3
  %12 = vst [vmem:[#allocation3] sm:$0x1] %v11
  // Predicated region
  $region2: #{attention_block_forward.5} parent=0 // pred_check
    _
  $region3: #{attention_block_forward.5} parent=0 // pred_check_branch
    %14 = sbr.rel (0) target = $region5
  $region4: #{attention_block_forward.5} parent=0 // pred_region
    _
  $region5: #{attention_block_forward.5} parent=0 // pred_fallthru
    _
  // Predicated region
  $region6: #{attention_block_forward.5} parent=0 // pred_check
    _
  $region7: #{attention_block_forward.5} parent=0 // pred_check_branch
    %16 = sbr.rel (0) target = $region9
  $region8: #{attention_block_forward.5} parent=0 // pred_region
    _
  $region9: #{attention_block_forward.5} parent=0 // pred_fallthru
    _
  // Predicated region
  $region10: #{attention_block_forward.5} parent=0 // pred_check
    _
  $region11: #{attention_block_forward.5} parent=0 // pred_check_branch
    %18 = sbr.rel (0) target = $region13
  $region12: #{attention_block_forward.5} parent=0 // pred_region
    _
  $region13: #{attention_block_forward.5} parent=0 // pred_fallthru
    _
  // Predicated region
  $region14: #{attention_block_forward.5} parent=0 // pred_check
    _
  $region15: #{attention_block_forward.5} parent=0 // pred_check_branch
    %20 = sbr.rel (0) target = $region17
  $region16: #{attention_block_forward.5} parent=0 // pred_region
    _
  $region17: #{attention_block_forward.5} parent=0 // pred_fallthru
    _
  %v21 = vld [vmem:[#allocation2] sm:$0x1]
  %v22 = vld [vmem:[#allocation3] sm:$0x1]
  %v23 = vld [vmem:[%s1] sm:$0x3]
  %25 = vset.pattern.permute.xlu0 0
  %26 = vperm.xlu0 %25, %v21
  %v27 = vpop.permute.xlu0 %26
  %v29 = vlaneseq
  %v30 = vshrl.u32 %v29, 7
  %v31 = vsub.s32 0, %v30
  %v32 = vrot.slane %v27, %v31
  %v33 = vmul.f32 %v23, %v32
  %35 = vset.pattern.permute.xlu0 0
  %36 = vperm.xlu0 %35, %v22
  %v37 = vpop.permute.xlu0 %36
  %v39 = vlaneseq
  %v40 = vshrl.u32 %v39, 7
  %v41 = vsub.s32 0, %v40
  %v42 = vrot.slane %v37, %v41
  %v43 = vadd.f32 %v33, %v42
  %v44 = vxor.u32 %v43, 2147483648
  %v45 = vmul.f32 %v44, 1.442695
  %v46 = vpow.pop %v45
  %v47 = vadd.f32 %v46, 1.0
  %v48 = vrcp.pop %v47
  %v49 = vmul.f32 1.0, %v48
  %v50 = vld [vmem:[%s0] sm:$0xff]
  %v51 = vld [vmem:[%s0 + $0x8] sm:$0xff]
  %v53 = vlaneseq
  %v54 = vshrl.u32 %v53, 7
  %v55 = vsub.s32 0, %v54
  %v56 = vrot.slane %v49, %v55
  %v57 = vlaneseq
  %v58 = vshrl.u32 %v57, 7
  %v59 = vsub.s32 1, %v58
  %v60 = vrot.slane %v49, %v59
  %v63 = vmul.f32 %v56, %v50
  %v64 = vmul.f32 %v60, %v51
  %65 = vst [vmem:[%s4] sm:$0xff] %v63
  %66 = vst [vmem:[%s4 + $0x8] sm:$0xff] %v64
  %s67 = scalar_lea.vmem %s1, 2
  %v68 = vld [vmem:[%s67] sm:$0x3]
  %v69 = vmul.f32 %v68, %v32
  %v70 = vadd.f32 %v69, %v42
  %v71 = vxor.u32 %v70, 2147483648
  %v72 = vmul.f32 %v71, 1.442695
  %v73 = vpow.pop %v72
  %v74 = vadd.f32 %v73, 1.0
  %v75 = vrcp.pop %v74
  %v76 = vmul.f32 1.0, %v75
  %s77 = scalar_lea.vmem %s0, 16
  %v78 = vld [vmem:[%s77] sm:$0xff]
  %v79 = vld [vmem:[%s77 + $0x8] sm:$0xff]
  %v81 = vlaneseq
  %v82 = vshrl.u32 %v81, 7
  %v83 = vsub.s32 0, %v82
  %v84 = vrot.slane %v76, %v83
  %v85 = vlaneseq
  %v86 = vshrl.u32 %v85, 7
  %v87 = vsub.s32 1, %v86
  %v88 = vrot.slane %v76, %v87
  %v91 = vmul.f32 %v84, %v78
  %v92 = vmul.f32 %v88, %v79
  %s93 = scalar_lea.vmem %s4, 16
  %94 = vst [vmem:[%s93] sm:$0xff] %v91
  %95 = vst [vmem:[%s93 + $0x8] sm:$0xff] %v92
  // Predicated region
  $region18: #{attention_block_forward.5} parent=0 // pred_check
    _
  $region19: #{attention_block_forward.5} parent=0 // pred_check_branch
    %97 = sbr.rel (0) target = $region21
  $region20: #{attention_block_forward.5} parent=0 // pred_region
    _
  $region21: #{attention_block_forward.5} parent=0 // pred_fallthru
    _
  // Predicated region
  $region22: #{attention_block_forward.5} parent=0 // pred_check
    _
  $region23: #{attention_block_forward.5} parent=0 // pred_check_branch
    %99 = sbr.rel (0) target = $region25
  $region24: #{attention_block_forward.5} parent=0 // pred_region
    _
  $region25: #{attention_block_forward.5} parent=0 // pred_fallthru
    _

// kernel: attention_block_forward.4
$region0: #{attention_block_forward.4}
  #allocation0 [shape = 'u32[]', space=smem, size = 0x4, offset = 0x4, fixed_abs, tag = 'smem constant byte address 0x4 - core index']
  #allocation1 [shape = 'u32[144,128]{1,0:T(1,128)}', space=vmem, size = 0x12000, scoped, tag = 'internal scratch']
  %s0 = inlined_call_operand.vmem [shape: f32[2,8,256], index: 0, kind: input, shape index: {}]
  %s1 = inlined_call_operand.vmem [shape: f32[2,8,256], index: 1, kind: input, shape index: {}]
  %s2 = inlined_call_operand.vmem [shape: f32[4,8], index: 2, kind: input, shape index: {}]
  %s3 = inlined_call_operand.vmem [shape: f32[4,8], index: 3, kind: input, shape index: {}]
  %s4 = inlined_call_operand.vmem [shape: f32[4,1], index: 4, kind: input, shape index: {}]
  %s5 = inlined_call_operand.vmem [shape: f32[1,4], index: 5, kind: input, shape index: {}]
  %s6 = inlined_call_operand.vmem [shape: f32[2,1,256], index: 6, kind: output, shape index: {0}]
  %s7 = inlined_call_operand.hbm [shape: f32[1,1,1], index: 7, kind: output, shape index: {1}]
  %s8 = inlined_call_operand.hbm [shape: f32[1,1,1], index: 8, kind: output, shape index: {2}]
  %9 = xla_tuple %s6, %s7, %s8
  %s10 = sld [smem:[#allocation0]]
  $region54: #{attention_block_forward.4} parent=0
    _
  %s12 = ssub.s32 1, %s10
  %s13 = scalar_select 0, %s12, %s10
  $region1: #{attention_block_forward.4} parent=0
    #allocation2 [shape = 'u8[512]{0}', space=vmem, size = 0x400, scoped, tag = 'output window, operand 1, single buffered']
    #allocation3 [shape = 's32[1]{0}', space=sflag, size = 0x4, scoped, tag = 'scoped memory for attention_block_forward.4']
    #allocation4 [shape = 'u8[512]{0}', space=vmem, size = 0x400, scoped, tag = 'output window, operand 2, single buffered']
    #allocation5 [shape = 's32[1]{0}', space=sflag, size = 0x4, scoped, tag = 'scoped memory for attention_block_forward.4']
    %14 = vsyncpa [#allocation3], 0
    %15 = vsyncpa [#allocation5], 0
    // Predicated region
    $region2: #{attention_block_forward.4} parent=1 // pred_check
      _
    $region3: #{attention_block_forward.4} parent=1 // pred_check_branch
      %17 = sbr.rel (0) target = $region5
    $region4: #{attention_block_forward.4} parent=1 // pred_region
      _
    $region5: #{attention_block_forward.4} parent=1 // pred_fallthru
      _
    // Predicated region
    $region6: #{attention_block_forward.4} parent=1 // pred_check
      _
    $region7: #{attention_block_forward.4} parent=1 // pred_check_branch
      %19 = sbr.rel (0) target = $region9
    $region8: #{attention_block_forward.4} parent=1 // pred_region
      _
    $region9: #{attention_block_forward.4} parent=1 // pred_fallthru
      _
    // Predicated region
    $region10: #{attention_block_forward.4} parent=1 // pred_check
      _
    $region11: #{attention_block_forward.4} parent=1 // pred_check_branch
      %21 = sbr.rel (0) target = $region13
    $region12: #{attention_block_forward.4} parent=1 // pred_region
      _
    $region13: #{attention_block_forward.4} parent=1 // pred_fallthru
      _
    // Predicated region
    $region14: #{attention_block_forward.4} parent=1 // pred_check
      _
    $region15: #{attention_block_forward.4} parent=1 // pred_check_branch
      %23 = sbr.rel (0) target = $region17
    $region16: #{attention_block_forward.4} parent=1 // pred_region
      _
    $region17: #{attention_block_forward.4} parent=1 // pred_fallthru
      _
    // Predicated region
    $region18: #{attention_block_forward.4} parent=1 // pred_check
      _
    $region19: #{attention_block_forward.4} parent=1 // pred_check_branch
      %25 = sbr.rel (0) target = $region21
    $region20: #{attention_block_forward.4} parent=1 // pred_region
      _
    $region21: #{attention_block_forward.4} parent=1 // pred_fallthru
      _
    // Predicated region
    $region22: #{attention_block_forward.4} parent=1 // pred_check
      _
    $region23: #{attention_block_forward.4} parent=1 // pred_check_branch
      %27 = sbr.rel (0) target = $region25
    $region24: #{attention_block_forward.4} parent=1 // pred_region
      _
    $region25: #{attention_block_forward.4} parent=1 // pred_fallthru
      _
    %p28 = scmp.eq.s32.totalorder 0, 0
    // Predicated region
    $region26: #{attention_block_forward.4} parent=1 // pred_check
      %p29 = pneg %p28
    $region27: #{attention_block_forward.4} parent=1 // pred_check_branch
      %31 = sbr.rel (%p29) target = $region29
    $region28: #{attention_block_forward.4} parent=1 // pred_region
      %vm32 = vcmask 0
      %33 = vst.msk [vmem:[#allocation2] sm:$0x1] %vm32, 0.0
      %34 = vst.msk [vmem:[#allocation4] sm:$0x1] %vm32, 0.0
    $region29: #{attention_block_forward.4} parent=1 // pred_fallthru
      _
    %v35 = vld [vmem:[%s4] sm:$0xf]
    %v36 = vld [vmem:[%s2] sm:$0xf]
    %v37 = vld [vmem:[%s0] sm:$0xff]
    %v38 = vld [vmem:[%s0 + $0x8] sm:$0xff]
    %v39 = vld [vmem:[%s3] sm:$0xf]
    %v40 = vld [vmem:[%s1] sm:$0xff]
    %v41 = vld [vmem:[%s1 + $0x8] sm:$0xff]
    %vm42 = vcmask 64512
    %v44 = vsel %vm42, %v39, 0
    %46 = vmatprep.subr.mxu0 %v41
    %47 = vmatpush1.msra.mxu0 %v40
    %48 = vmatprep.subr.mxu0 0.0
    %49 = vmatpush1.msra.mxu0 0.0
    %50 = vmatprep.subr.mxu0 0.0
    %51 = vmatpush1.msra.mxu0 0.0
    %52 = vmatprep.subr.mxu0 0.0
    %53 = vmatpush1.msra.mxu0 0.0
    %54 = vmatprep.subr.mxu0 0.0
    %55 = vmatpush1.msra.mxu0 0.0
    %56 = vmatprep.subr.mxu0 0.0
    %57 = vmatpush1.msra.mxu0 0.0
    %58 = vmatprep.subr.mxu0 0.0
    %59 = vmatpush1.msra.mxu0 0.0
    %60 = vmatprep.subr.mxu0 0.0
    %61 = vmatpush1.msra.mxu0 0.0
    %62 = vmatprep.subr.mxu0 0.0
    %63 = vmatpush1.msra.mxu0 0.0
    %64 = vmatprep.subr.mxu0 0.0
    %65 = vmatpush1.msra.mxu0 0.0
    %66 = vmatprep.subr.mxu0 0.0
    %67 = vmatpush1.msra.mxu0 0.0
    %68 = vmatprep.subr.mxu0 0.0
    %69 = vmatpush1.msra.mxu0 0.0
    %70 = vmatprep.subr.mxu0 0.0
    %71 = vmatpush1.msra.mxu0 0.0
    %72 = vmatprep.subr.mxu0 0.0
    %73 = vmatpush1.msra.mxu0 0.0
    %74 = vmatprep.subr.mxu0 0.0
    %75 = vmatpush1.msra.mxu0 0.0
    %76 = vmatprep.subr.mxu0 0.0
    %77 = vmatpush1.msra.mxu0 0.0
    %78 = vmatprep.subr.mxu0 0.0
    %79 = vmatpush1.msra.mxu0 0.0
    %80 = vmatprep.subr.mxu0 0.0
    %81 = vmatpush1.msra.mxu0 0.0
    %82 = vmatprep.subr.mxu0 0.0
    %83 = vmatpush1.msra.mxu0 0.0
    %84 = vmatprep.subr.mxu0 0.0
    %85 = vmatpush1.msra.mxu0 0.0
    %86 = vmatprep.subr.mxu0 0.0
    %87 = vmatpush1.msra.mxu0 0.0
    %88 = vmatprep.subr.mxu0 0.0
    %89 = vmatpush1.msra.mxu0 0.0
    %90 = vmatprep.subr.mxu0 0.0
    %91 = vmatpush1.msra.mxu0 0.0
    %92 = vmatprep.subr.mxu0 0.0
    %93 = vmatpush1.msra.mxu0 0.0
    %94 = vmatprep.subr.mxu0 0.0
    %95 = vmatpush1.msra.mxu0 0.0
    %96 = vmatprep.subr.mxu0 0.0
    %97 = vmatpush1.msra.mxu0 0.0
    %98 = vmatprep.subr.mxu0 0.0
    %99 = vmatpush1.msra.mxu0 0.0
    %100 = vmatprep.subr.mxu0 0.0
    %101 = vmatpush1.msra.mxu0 0.0
    %102 = vmatprep.subr.mxu0 0.0
    %103 = vmatpush1.msra.mxu0 0.0
    %104 = vmatprep.subr.mxu0 0.0
    %105 = vmatpush1.msra.mxu0 0.0
    %106 = vmatprep.subr.mxu0 0.0
    %107 = vmatpush1.msra.mxu0 0.0
    %108 = vmatprep.subr.mxu0 0.0
    %109 = vmatpush1.msra.mxu0 0.0
    %110 = vmatprep.mubr.f32.mxu0 0.0
    %111 = vmatmul.mubr.f32.gmra.mrb[0].mxu0 %v44
    %v112 = vpop.f32.mrb[0].mxu0
    %v113 = vadd.f32 0.0, %v112
    %v114 = vpop.f32.mrb[0].mxu0
    %v115 = vadd.f32 0.0, %v114
    %116 = vdwg.mxu0
    %v118 = vsel %vm42, %v36, 0
    %120 = vmatprep.subr.mxu0 %v38
    %121 = vmatpush1.msra.mxu0 %v37
    %122 = vmatprep.subr.mxu0 0.0
    %123 = vmatpush1.msra.mxu0 0.0
    %124 = vmatprep.subr.mxu0 0.0
    %125 = vmatpush1.msra.mxu0 0.0
    %126 = vmatprep.subr.mxu0 0.0
    %127 = vmatpush1.msra.mxu0 0.0
    %128 = vmatprep.subr.mxu0 0.0
    %129 = vmatpush1.msra.mxu0 0.0
    %130 = vmatprep.subr.mxu0 0.0
    %131 = vmatpush1.msra.mxu0 0.0
    %132 = vmatprep.subr.mxu0 0.0
    %133 = vmatpush1.msra.mxu0 0.0
    %134 = vmatprep.subr.mxu0 0.0
    %135 = vmatpush1.msra.mxu0 0.0
    %136 = vmatprep.subr.mxu0 0.0
    %137 = vmatpush1.msra.mxu0 0.0
    %138 = vmatprep.subr.mxu0 0.0
    %139 = vmatpush1.msra.mxu0 0.0
    %140 = vmatprep.subr.mxu0 0.0
    %141 = vmatpush1.msra.mxu0 0.0
    %142 = vmatprep.subr.mxu0 0.0
    %143 = vmatpush1.msra.mxu0 0.0
    %144 = vmatprep.subr.mxu0 0.0
    %145 = vmatpush1.msra.mxu0 0.0
    %146 = vmatprep.subr.mxu0 0.0
    %147 = vmatpush1.msra.mxu0 0.0
    %148 = vmatprep.subr.mxu0 0.0
    %149 = vmatpush1.msra.mxu0 0.0
    %150 = vmatprep.subr.mxu0 0.0
    %151 = vmatpush1.msra.mxu0 0.0
    %152 = vmatprep.subr.mxu0 0.0
    %153 = vmatpush1.msra.mxu0 0.0
    %154 = vmatprep.subr.mxu0 0.0
    %155 = vmatpush1.msra.mxu0 0.0
    %156 = vmatprep.subr.mxu0 0.0
    %157 = vmatpush1.msra.mxu0 0.0
    %158 = vmatprep.subr.mxu0 0.0
    %159 = vmatpush1.msra.mxu0 0.0
    %160 = vmatprep.subr.mxu0 0.0
    %161 = vmatpush1.msra.mxu0 0.0
    %162 = vmatprep.subr.mxu0 0.0
    %163 = vmatpush1.msra.mxu0 0.0
    %164 = vmatprep.subr.mxu0 0.0
    %165 = vmatpush1.msra.mxu0 0.0
    %166 = vmatprep.subr.mxu0 0.0
    %167 = vmatpush1.msra.mxu0 0.0
    %168 = vmatprep.subr.mxu0 0.0
    %169 = vmatpush1.msra.mxu0 0.0
    %170 = vmatprep.subr.mxu0 0.0
    %171 = vmatpush1.msra.mxu0 0.0
    %172 = vmatprep.subr.mxu0 0.0
    %173 = vmatpush1.msra.mxu0 0.0
    %174 = vmatprep.subr.mxu0 0.0
    %175 = vmatpush1.msra.mxu0 0.0
    %176 = vmatprep.subr.mxu0 0.0
    %177 = vmatpush1.msra.mxu0 0.0
    %178 = vmatprep.subr.mxu0 0.0
    %179 = vmatpush1.msra.mxu0 0.0
    %180 = vmatprep.subr.mxu0 0.0
    %181 = vmatpush1.msra.mxu0 0.0
    %182 = vmatprep.subr.mxu0 0.0
    %183 = vmatpush1.msra.mxu0 0.0
    %184 = vmatprep.mubr.f32.mxu0 0.0
    %185 = vmatmul.mubr.f32.gmra.mrb[0].mxu0 %v118
    %v186 = vpop.f32.mrb[0].mxu0
    %v187 = vadd.f32 %v113, %v186
    %v188 = vpop.f32.mrb[0].mxu0
    %v189 = vadd.f32 %v115, %v188
    %190 = vdwg.mxu0
    %192 = vset.pattern.permute.xlu0 0
    %193 = vperm.xlu0 %192, %v35
    %v194 = vpop.permute.xlu0 %193
    %v196 = vadd.f32 %v187, %v194
    %v197 = vadd.f32 %v189, %v194
    %v198 = vmax.f32 %v196, 0.0
    %v199 = vmax.f32 %v197, 0.0
    %v200 = vld [vmem:[%s5] sm:$0x1]
    %vm201 = vcmask 31744
    %v203 = vsel %vm201, %v200, 0
    %vm205 = vcmask 1043456
    %v207 = vsel %vm205, %v198, 0
    %v210 = vsel %vm205, %v199, 0
    %212 = vmatprep.subr.mxu0 %v210
    %213 = vmatpush1.msra.mxu0 %v207
    %214 = vmatprep.subr.mxu0 0.0
    %215 = vmatpush1.msra.mxu0 0.0
    %216 = vmatprep.subr.mxu0 0.0
    %217 = vmatpush1.msra.mxu0 0.0
    %218 = vmatprep.subr.mxu0 0.0
    %219 = vmatpush1.msra.mxu0 0.0
    %220 = vmatprep.subr.mxu0 0.0
    %221 = vmatpush1.msra.mxu0 0.0
    %222 = vmatprep.subr.mxu0 0.0
    %223 = vmatpush1.msra.mxu0 0.0
    %224 = vmatprep.subr.mxu0 0.0
    %225 = vmatpush1.msra.mxu0 0.0
    %226 = vmatprep.subr.mxu0 0.0
    %227 = vmatpush1.msra.mxu0 0.0
    %228 = vmatprep.subr.mxu0 0.0
    %229 = vmatpush1.msra.mxu0 0.0
    %230 = vmatprep.subr.mxu0 0.0
    %231 = vmatpush1.msra.mxu0 0.0
    %232 = vmatprep.subr.mxu0 0.0
    %233 = vmatpush1.msra.mxu0 0.0
    %234 = vmatprep.subr.mxu0 0.0
    %235 = vmatpush1.msra.mxu0 0.0
    %236 = vmatprep.subr.mxu0 0.0
    %237 = vmatpush1.msra.mxu0 0.0
    %238 = vmatprep.subr.mxu0 0.0
    %239 = vmatpush1.msra.mxu0 0.0
    %240 = vmatprep.subr.mxu0 0.0
    %241 = vmatpush1.msra.mxu0 0.0
    %242 = vmatprep.subr.mxu0 0.0
    %243 = vmatpush1.msra.mxu0 0.0
    %244 = vmatprep.subr.mxu0 0.0
    %245 = vmatpush1.msra.mxu0 0.0
    %246 = vmatprep.subr.mxu0 0.0
    %247 = vmatpush1.msra.mxu0 0.0
    %248 = vmatprep.subr.mxu0 0.0
    %249 = vmatpush1.msra.mxu0 0.0
    %250 = vmatprep.subr.mxu0 0.0
    %251 = vmatpush1.msra.mxu0 0.0
    %252 = vmatprep.subr.mxu0 0.0
    %253 = vmatpush1.msra.mxu0 0.0
    %254 = vmatprep.subr.mxu0 0.0
    %255 = vmatpush1.msra.mxu0 0.0
    %256 = vmatprep.subr.mxu0 0.0
    %257 = vmatpush1.msra.mxu0 0.0
    %258 = vmatprep.subr.mxu0 0.0
    %259 = vmatpush1.msra.mxu0 0.0
    %260 = vmatprep.subr.mxu0 0.0
    %261 = vmatpush1.msra.mxu0 0.0
    %262 = vmatprep.subr.mxu0 0.0
    %263 = vmatpush1.msra.mxu0 0.0
    %264 = vmatprep.subr.mxu0 0.0
    %265 = vmatpush1.msra.mxu0 0.0
    %266 = vmatprep.subr.mxu0 0.0
    %267 = vmatpush1.msra.mxu0 0.0
    %268 = vmatprep.subr.mxu0 0.0
    %269 = vmatpush1.msra.mxu0 0.0
    %270 = vmatprep.subr.mxu0 0.0
    %271 = vmatpush1.msra.mxu0 0.0
    %272 = vmatprep.subr.mxu0 0.0
    %273 = vmatpush1.msra.mxu0 0.0
    %274 = vmatprep.subr.mxu0 0.0
    %275 = vmatpush1.msra.mxu0 0.0
    %276 = vmatprep.mubr.f32.mxu0 0.0
    %277 = vmatmul.mubr.f32.gmra.mrb[0].mxu0 %v203
    %v278 = vpop.f32.mrb[0].mxu0
    %v279 = vadd.f32 0.0, %v278
    %v280 = vpop.f32.mrb[0].mxu0
    %v281 = vadd.f32 0.0, %v280
    %282 = vdwg.mxu0
    %v285 = vcombine.low %v279, %v281
    %v287 = vunpack.c.l.s4 1966171168
    %v288 = vunpack.c.0.s8 %v287
    %v289 = vlaneseq
    %v290 = vshrl.u32 %v289, 7
    %v291 = vsub.s32 %v288, %v290
    %v292 = vrot.slane %v285, %v291
    %v294 = vunpack.c.l.s4 1966171168
    %v295 = vunpack.c.0.s8 %v294
    %v296 = vlaneseq
    %v297 = vshrl.u32 %v296, 7
    %v298 = vsub.s32 %v295, %v297
    %v299 = vrot.slane %v292, %v298
    %v301 = vlaneseq
    %vm302 = vcmp.ge.s32.totalorder %v301, 0
    %vm303 = vcmp.lt.s32.totalorder %v301, 256
    %vm304 = vmand %vm302, %vm303
    %305 = vst.msk [vmem:[%s6] sm:$0x3] %vm304, %v299
    %vm306 = vcmask 1040384
    %v307 = vsel %vm306, %v279, 0.0
    %v308 = vsel %vm306, %v281, 0.0
    %v309 = vadd.f32 %v307, %v308
    %310 = vadd.xlane.f32.xlu0 %v309
    %v311 = vpop.xlane.xlu0 %310
    %v312 = vadd.f32 %v311, 0.0
    %v313 = vmul.f32 %v279, %v279
    %v314 = vmul.f32 %v281, %v281
    %v315 = vsel %vm306, %v313, 0.0
    %v316 = vsel %vm306, %v314, 0.0
    %v317 = vadd.f32 %v315, %v316
    %318 = vadd.xlane.f32.xlu0 %v317
    %v319 = vpop.xlane.xlu0 %318
    %v320 = vadd.f32 %v319, 0.0
    %v321 = vld [vmem:[%s2] sm:$0xf]
    %s322 = scalar_lea.vmem %s0, 16
    %v323 = vld [vmem:[%s322] sm:$0xff]
    %v324 = vld [vmem:[%s322 + $0x8] sm:$0xff]
    %v325 = vld [vmem:[%s3] sm:$0xf]
    %s326 = scalar_lea.vmem %s1, 16
    %v327 = vld [vmem:[%s326] sm:$0xff]
    %v328 = vld [vmem:[%s326 + $0x8] sm:$0xff]
    %v330 = vsel %vm42, %v325, 0
    %332 = vmatprep.subr.mxu0 %v328
    %333 = vmatpush1.msra.mxu0 %v327
    %334 = vmatprep.subr.mxu0 0.0
    %335 = vmatpush1.msra.mxu0 0.0
    %336 = vmatprep.subr.mxu0 0.0
    %337 = vmatpush1.msra.mxu0 0.0
    %338 = vmatprep.subr.mxu0 0.0
    %339 = vmatpush1.msra.mxu0 0.0
    %340 = vmatprep.subr.mxu0 0.0
    %341 = vmatpush1.msra.mxu0 0.0
    %342 = vmatprep.subr.mxu0 0.0
    %343 = vmatpush1.msra.mxu0 0.0
    %344 = vmatprep.subr.mxu0 0.0
    %345 = vmatpush1.msra.mxu0 0.0
    %346 = vmatprep.subr.mxu0 0.0
    %347 = vmatpush1.msra.mxu0 0.0
    %348 = vmatprep.subr.mxu0 0.0
    %349 = vmatpush1.msra.mxu0 0.0
    %350 = vmatprep.subr.mxu0 0.0
    %351 = vmatpush1.msra.mxu0 0.0
    %352 = vmatprep.subr.mxu0 0.0
    %353 = vmatpush1.msra.mxu0 0.0
    %354 = vmatprep.subr.mxu0 0.0
    %355 = vmatpush1.msra.mxu0 0.0
    %356 = vmatprep.subr.mxu0 0.0
    %357 = vmatpush1.msra.mxu0 0.0
    %358 = vmatprep.subr.mxu0 0.0
    %359 = vmatpush1.msra.mxu0 0.0
    %360 = vmatprep.subr.mxu0 0.0
    %361 = vmatpush1.msra.mxu0 0.0
    %362 = vmatprep.subr.mxu0 0.0
    %363 = vmatpush1.msra.mxu0 0.0
    %364 = vmatprep.subr.mxu0 0.0
    %365 = vmatpush1.msra.mxu0 0.0
    %366 = vmatprep.subr.mxu0 0.0
    %367 = vmatpush1.msra.mxu0 0.0
    %368 = vmatprep.subr.mxu0 0.0
    %369 = vmatpush1.msra.mxu0 0.0
    %370 = vmatprep.subr.mxu0 0.0
    %371 = vmatpush1.msra.mxu0 0.0
    %372 = vmatprep.subr.mxu0 0.0
    %373 = vmatpush1.msra.mxu0 0.0
    %374 = vmatprep.subr.mxu0 0.0
    %375 = vmatpush1.msra.mxu0 0.0
    %376 = vmatprep.subr.mxu0 0.0
    %377 = vmatpush1.msra.mxu0 0.0
    %378 = vmatprep.subr.mxu0 0.0
    %379 = vmatpush1.msra.mxu0 0.0
    %380 = vmatprep.subr.mxu0 0.0
    %381 = vmatpush1.msra.mxu0 0.0
    %382 = vmatprep.subr.mxu0 0.0
    %383 = vmatpush1.msra.mxu0 0.0
    %384 = vmatprep.subr.mxu0 0.0
    %385 = vmatpush1.msra.mxu0 0.0
    %386 = vmatprep.subr.mxu0 0.0
    %387 = vmatpush1.msra.mxu0 0.0
    %388 = vmatprep.subr.mxu0 0.0
    %389 = vmatpush1.msra.mxu0 0.0
    %390 = vmatprep.subr.mxu0 0.0
    %391 = vmatpush1.msra.mxu0 0.0
    %392 = vmatprep.subr.mxu0 0.0
    %393 = vmatpush1.msra.mxu0 0.0
    %394 = vmatprep.subr.mxu0 0.0
    %395 = vmatpush1.msra.mxu0 0.0
    %396 = vmatprep.mubr.f32.mxu0 0.0
    %397 = vmatmul.mubr.f32.gmra.mrb[0].mxu0 %v330
    %v398 = vpop.f32.mrb[0].mxu0
    %v399 = vadd.f32 0.0, %v398
    %v400 = vpop.f32.mrb[0].mxu0
    %v401 = vadd.f32 0.0, %v400
    %402 = vdwg.mxu0
    %v404 = vsel %vm42, %v321, 0
    %406 = vmatprep.subr.mxu0 %v324
    %407 = vmatpush1.msra.mxu0 %v323
    %408 = vmatprep.subr.mxu0 0.0
    %409 = vmatpush1.msra.mxu0 0.0
    %410 = vmatprep.subr.mxu0 0.0
    %411 = vmatpush1.msra.mxu0 0.0
    %412 = vmatprep.subr.mxu0 0.0
    %413 = vmatpush1.msra.mxu0 0.0
    %414 = vmatprep.subr.mxu0 0.0
    %415 = vmatpush1.msra.mxu0 0.0
    %416 = vmatprep.subr.mxu0 0.0
    %417 = vmatpush1.msra.mxu0 0.0
    %418 = vmatprep.subr.mxu0 0.0
    %419 = vmatpush1.msra.mxu0 0.0
    %420 = vmatprep.subr.mxu0 0.0
    %421 = vmatpush1.msra.mxu0 0.0
    %422 = vmatprep.subr.mxu0 0.0
    %423 = vmatpush1.msra.mxu0 0.0
    %424 = vmatprep.subr.mxu0 0.0
    %425 = vmatpush1.msra.mxu0 0.0
    %426 = vmatprep.subr.mxu0 0.0
    %427 = vmatpush1.msra.mxu0 0.0
    %428 = vmatprep.subr.mxu0 0.0
    %429 = vmatpush1.msra.mxu0 0.0
    %430 = vmatprep.subr.mxu0 0.0
    %431 = vmatpush1.msra.mxu0 0.0
    %432 = vmatprep.subr.mxu0 0.0
    %433 = vmatpush1.msra.mxu0 0.0
    %434 = vmatprep.subr.mxu0 0.0
    %435 = vmatpush1.msra.mxu0 0.0
    %436 = vmatprep.subr.mxu0 0.0
    %437 = vmatpush1.msra.mxu0 0.0
    %438 = vmatprep.subr.mxu0 0.0
    %439 = vmatpush1.msra.mxu0 0.0
    %440 = vmatprep.subr.mxu0 0.0
    %441 = vmatpush1.msra.mxu0 0.0
    %442 = vmatprep.subr.mxu0 0.0
    %443 = vmatpush1.msra.mxu0 0.0
    %444 = vmatprep.subr.mxu0 0.0
    %445 = vmatpush1.msra.mxu0 0.0
    %446 = vmatprep.subr.mxu0 0.0
    %447 = vmatpush1.msra.mxu0 0.0
    %448 = vmatprep.subr.mxu0 0.0
    %449 = vmatpush1.msra.mxu0 0.0
    %450 = vmatprep.subr.mxu0 0.0
    %451 = vmatpush1.msra.mxu0 0.0
    %452 = vmatprep.subr.mxu0 0.0
    %453 = vmatpush1.msra.mxu0 0.0
    %454 = vmatprep.subr.mxu0 0.0
    %455 = vmatpush1.msra.mxu0 0.0
    %456 = vmatprep.subr.mxu0 0.0
    %457 = vmatpush1.msra.mxu0 0.0
    %458 = vmatprep.subr.mxu0 0.0
    %459 = vmatpush1.msra.mxu0 0.0
    %460 = vmatprep.subr.mxu0 0.0
    %461 = vmatpush1.msra.mxu0 0.0
    %462 = vmatprep.subr.mxu0 0.0
    %463 = vmatpush1.msra.mxu0 0.0
    %464 = vmatprep.subr.mxu0 0.0
    %465 = vmatpush1.msra.mxu0 0.0
    %466 = vmatprep.subr.mxu0 0.0
    %467 = vmatpush1.msra.mxu0 0.0
    %468 = vmatprep.subr.mxu0 0.0
    %469 = vmatpush1.msra.mxu0 0.0
    %470 = vmatprep.mubr.f32.mxu0 0.0
    %471 = vmatmul.mubr.f32.gmra.mrb[0].mxu0 %v404
    %v472 = vpop.f32.mrb[0].mxu0
    %v473 = vadd.f32 %v399, %v472
    %v474 = vpop.f32.mrb[0].mxu0
    %v475 = vadd.f32 %v401, %v474
    %476 = vdwg.mxu0
    %v477 = vadd.f32 %v473, %v194
    %v478 = vadd.f32 %v475, %v194
    %v479 = vmax.f32 %v477, 0.0
    %v480 = vmax.f32 %v478, 0.0
    %v481 = vld [vmem:[%s5] sm:$0x1]
    %v483 = vsel %vm201, %v481, 0
    %v486 = vsel %vm205, %v479, 0
    %v489 = vsel %vm205, %v480, 0
    %491 = vmatprep.subr.mxu0 %v489
    %492 = vmatpush1.msra.mxu0 %v486
    %493 = vmatprep.subr.mxu0 0.0
    %494 = vmatpush1.msra.mxu0 0.0
    %495 = vmatprep.subr.mxu0 0.0
    %496 = vmatpush1.msra.mxu0 0.0
    %497 = vmatprep.subr.mxu0 0.0
    %498 = vmatpush1.msra.mxu0 0.0
    %499 = vmatprep.subr.mxu0 0.0
    %500 = vmatpush1.msra.mxu0 0.0
    %501 = vmatprep.subr.mxu0 0.0
    %502 = vmatpush1.msra.mxu0 0.0
    %503 = vmatprep.subr.mxu0 0.0
    %504 = vmatpush1.msra.mxu0 0.0
    %505 = vmatprep.subr.mxu0 0.0
    %506 = vmatpush1.msra.mxu0 0.0
    %507 = vmatprep.subr.mxu0 0.0
    %508 = vmatpush1.msra.mxu0 0.0
    %509 = vmatprep.subr.mxu0 0.0
    %510 = vmatpush1.msra.mxu0 0.0
    %511 = vmatprep.subr.mxu0 0.0
    %512 = vmatpush1.msra.mxu0 0.0
    %513 = vmatprep.subr.mxu0 0.0
    %514 = vmatpush1.msra.mxu0 0.0
    %515 = vmatprep.subr.mxu0 0.0
    %516 = vmatpush1.msra.mxu0 0.0
    %517 = vmatprep.subr.mxu0 0.0
    %518 = vmatpush1.msra.mxu0 0.0
    %519 = vmatprep.subr.mxu0 0.0
    %520 = vmatpush1.msra.mxu0 0.0
    %521 = vmatprep.subr.mxu0 0.0
    %522 = vmatpush1.msra.mxu0 0.0
    %523 = vmatprep.subr.mxu0 0.0
    %524 = vmatpush1.msra.mxu0 0.0
    %525 = vmatprep.subr.mxu0 0.0
    %526 = vmatpush1.msra.mxu0 0.0
    %527 = vmatprep.subr.mxu0 0.0
    %528 = vmatpush1.msra.mxu0 0.0
    %529 = vmatprep.subr.mxu0 0.0
    %530 = vmatpush1.msra.mxu0 0.0
    %531 = vmatprep.subr.mxu0 0.0
    %532 = vmatpush1.msra.mxu0 0.0
    %533 = vmatprep.subr.mxu0 0.0
    %534 = vmatpush1.msra.mxu0 0.0
    %535 = vmatprep.subr.mxu0 0.0
    %536 = vmatpush1.msra.mxu0 0.0
    %537 = vmatprep.subr.mxu0 0.0
    %538 = vmatpush1.msra.mxu0 0.0
    %539 = vmatprep.subr.mxu0 0.0
    %540 = vmatpush1.msra.mxu0 0.0
    %541 = vmatprep.subr.mxu0 0.0
    %542 = vmatpush1.msra.mxu0 0.0
    %543 = vmatprep.subr.mxu0 0.0
    %544 = vmatpush1.msra.mxu0 0.0
    %545 = vmatprep.subr.mxu0 0.0
    %546 = vmatpush1.msra.mxu0 0.0
    %547 = vmatprep.subr.mxu0 0.0
    %548 = vmatpush1.msra.mxu0 0.0
    %549 = vmatprep.subr.mxu0 0.0
    %550 = vmatpush1.msra.mxu0 0.0
    %551 = vmatprep.subr.mxu0 0.0
    %552 = vmatpush1.msra.mxu0 0.0
    %553 = vmatprep.subr.mxu0 0.0
    %554 = vmatpush1.msra.mxu0 0.0
    %555 = vmatprep.mubr.f32.mxu0 0.0
    %556 = vmatmul.mubr.f32.gmra.mrb[0].mxu0 %v483
    %v557 = vpop.f32.mrb[0].mxu0
    %v558 = vadd.f32 0.0, %v557
    %v559 = vpop.f32.mrb[0].mxu0
    %v560 = vadd.f32 0.0, %v559
    %561 = vdwg.mxu0
    %v564 = vcombine.low %v558, %v560
    %v566 = vunpack.c.l.s4 1966171168
    %v567 = vunpack.c.0.s8 %v566
    %v568 = vlaneseq
    %v569 = vshrl.u32 %v568, 7
    %v570 = vsub.s32 %v567, %v569
    %v571 = vrot.slane %v564, %v570
    %v573 = vunpack.c.l.s4 1966171168
    %v574 = vunpack.c.0.s8 %v573
    %v575 = vlaneseq
    %v576 = vshrl.u32 %v575, 7
    %v577 = vsub.s32 %v574, %v576
    %v578 = vrot.slane %v571, %v577
    %s580 = scalar_lea.vmem %s6, 2
    %581 = vst.msk [vmem:[%s580] sm:$0x3] %vm304, %v578
    %v582 = vsel %vm306, %v558, 0.0
    %v583 = vsel %vm306, %v560, 0.0
    %v584 = vadd.f32 %v582, %v583
    %585 = vadd.xlane.f32.xlu0 %v584
    %v586 = vpop.xlane.xlu0 %585
    %v587 = vadd.f32 %v312, %v586
    %v588 = vmul.f32 %v558, %v558
    %v589 = vmul.f32 %v560, %v560
    %v590 = vsel %vm306, %v588, 0.0
    %v591 = vsel %vm306, %v589, 0.0
    %v592 = vadd.f32 %v590, %v591
    %593 = vadd.xlane.f32.xlu0 %v592
    %v594 = vpop.xlane.xlu0 %593
    %v595 = vadd.f32 %v320, %v594
    %v596 = vld [vmem:[#allocation2] sm:$0x1]
    %v597 = vadd.f32 %v596, %v587
    %vm598 = vcmask 0
    %599 = vst.msk [vmem:[#allocation2] sm:$0x1] %vm598, %v597
    %v600 = vld [vmem:[#allocation4] sm:$0x1]
    %v601 = vadd.f32 %v600, %v595
    %602 = vst.msk [vmem:[#allocation4] sm:$0x1] %vm598, %v601
    // Predicated region
    $region30: #{attention_block_forward.4} parent=1 // pred_check
      _
    $region31: #{attention_block_forward.4} parent=1 // pred_check_branch
      %604 = sbr.rel (0) target = $region33
    $region32: #{attention_block_forward.4} parent=1 // pred_region
      _
    $region33: #{attention_block_forward.4} parent=1 // pred_fallthru
      _
    // Predicated region
    $region34: #{attention_block_forward.4} parent=1 // pred_check
      _
    $region35: #{attention_block_forward.4} parent=1 // pred_check_branch
      %606 = sbr.rel (0) target = $region37
    $region36: #{attention_block_forward.4} parent=1 // pred_region
      %s608 = ssub.s32 16, 16
      %609 = vsyncadd [#allocation3], %s608
      %s611 = sshll.u32 [#allocation2], 4
      %s612 = int_to_ptr.vmem [resolvable:$true] %s611
      %614 = dma.vmem_to_hbm [thread:$0]  %s612, 16, %s7, [#allocation3]
    $region37: #{attention_block_forward.4} parent=1 // pred_fallthru
      _
    // Predicated region
    $region38: #{attention_block_forward.4} parent=1 // pred_check
      _
    $region39: #{attention_block_forward.4} parent=1 // pred_check_branch
      %616 = sbr.rel (0) target = $region41
    $region40: #{attention_block_forward.4} parent=1 // pred_region
      %s618 = ssub.s32 16, 16
      %619 = vsyncadd [#allocation5], %s618
      %s621 = sshll.u32 [#allocation4], 4
      %s622 = int_to_ptr.vmem [resolvable:$true] %s621
      %624 = dma.vmem_to_hbm [thread:$0]  %s622, 16, %s8, [#allocation5]
    $region41: #{attention_block_forward.4} parent=1 // pred_fallthru
      _
    // Predicated region
    $region42: #{attention_block_forward.4} parent=1 // pred_check
      _
    $region43: #{attention_block_forward.4} parent=1 // pred_check_branch
      %626 = sbr.rel (0) target = $region45
    $region44: #{attention_block_forward.4} parent=1 // pred_region
      _
    $region45: #{attention_block_forward.4} parent=1 // pred_fallthru
      _
    // Predicated region
    $region46: #{attention_block_forward.4} parent=1 // pred_check
      _
    $region47: #{attention_block_forward.4} parent=1 // pred_check_branch
      %628 = sbr.rel (0) target = $region49
    $region48: #{attention_block_forward.4} parent=1 // pred_region
      %629 = dma.done [#allocation3], 16
    $region49: #{attention_block_forward.4} parent=1 // pred_fallthru
      _
    // Predicated region
    $region50: #{attention_block_forward.4} parent=1 // pred_check
      _
    $region51: #{attention_block_forward.4} parent=1 // pred_check_branch
      %631 = sbr.rel (0) target = $region53
    $region52: #{attention_block_forward.4} parent=1 // pred_region
      %632 = dma.done [#allocation5], 16
    $region53: #{attention_block_forward.4} parent=1 // pred_fallthru
      _
    %633 = vsyncpa [#allocation3], 1
    %634 = vsyncpa [#allocation5], 1

</llo_original>
